<compile_context>
chip_gen: v7x
topology: tpu7x:2x2x1
jax: 0.10.0
libtpu: 0.0.40
codegen_flags: <defaults>
</compile_context>

<pallas_src>
import math

import jax
import jax.numpy as jnp
import numpy as np
from jax import lax
from jax.experimental import pallas as pl
from jax.experimental.pallas import tpu as pltpu  # noqa: F401  (TPU backend)


# ----------------------------------------------------------------------------
# Fused kernel: BN1(folded) -> QKV/edge proj -> edge attention -> scatter ->
#               O proj + residual -> BN2(folded) -> MLP(SiLU) + residual
# ----------------------------------------------------------------------------
def _gt_forward_kernel(x_ref, e_ref, grow_ref, gcol_ref, scat_ref, hsum_ref,
                       wqkv_ref, bqkv_ref, we_ref, be_ref,
                       wo_ref, bo_ref, w1_ref, b1_ref, w2_ref,
                       o_ref):
    f32 = jnp.float32
    x = x_ref[...]                                   # [N, C] raw node feats
    e = e_ref[...]                                   # [E, C] raw edge feats
    c = x.shape[1]
    h_heads = hsum_ref.shape[1]
    d = c // h_heads
    inv_sqrt_d = 1.0 / math.sqrt(float(d))

    # Fused Q/K/V projection (node BatchNorm1 already folded into wqkv/bqkv).
    qkv = jnp.dot(x, wqkv_ref[...], preferred_element_type=f32) + bqkv_ref[...]
    q = qkv[:, :c]
    k = qkv[:, c:2 * c]
    v = qkv[:, 2 * c:]

    # Edge projection (edge BatchNorm1 folded).
    ep = jnp.dot(e, we_ref[...], preferred_element_type=f32) + be_ref[...]

    # Per-edge endpoint gathers as one-hot matmuls (MXU).
    grow = grow_ref[...]                             # [E, N] one-hot(row)
    gcol = gcol_ref[...]                             # [E, N] one-hot(col)
    k_row = jnp.dot(grow, k, preferred_element_type=f32)   # K[row]  [E, C]
    q_col = jnp.dot(gcol, q, preferred_element_type=f32)   # Q[col]  [E, C]
    v_row = jnp.dot(grow, v, preferred_element_type=f32)   # V[row]  [E, C]

    # alpha = clamp(K[row]*Q[col]/sqrt(D), -5, 5) * edge_proj
    alpha = jnp.clip(k_row * q_col * inv_sqrt_d, -5.0, 5.0) * ep    # [E, C]

    # Per-head sum over channels via head-membership matrix (no reshapes).
    hsum = hsum_ref[...]                             # [C, H]
    score = jnp.dot(alpha, hsum, preferred_element_type=f32)        # [E, H]
    alphax = jnp.exp(jnp.clip(score, -5.0, 5.0))                    # [E, H]

    # Broadcast per-head weight back over its channels: [E, H] x [C, H]^T.
    alphax_c = lax.dot_general(alphax, hsum, (((1,), (1,)), ((), ())),
                               preferred_element_type=f32)          # [E, C]
    msg = v_row * alphax_c                                          # [E, C]

    # scatter_add onto destination node (col) as a [N, E] one-hot matmul.
    scat = scat_ref[...]                                            # [N, E]
    w_v = jnp.dot(scat, msg, preferred_element_type=f32)            # [N, C]
    z = jnp.dot(scat, alphax, preferred_element_type=f32)           # [N, H]
    z_c = lax.dot_general(z, hsum, (((1,), (1,)), ((), ())),
                          preferred_element_type=f32)               # [N, C]

    h_attn = w_v * pl.reciprocal(z_c + 1e-6, approx=True)           # [N, C]

    # Output projection + residual 1 (residual uses the raw input feats).
    x1 = x + jnp.dot(h_attn, wo_ref[...], preferred_element_type=f32) + bo_ref[...]

    # Node MLP (BN2 folded into w1/b1): Linear -> SiLU -> Linear, residual 2.
    h = jnp.dot(x1, w1_ref[...], preferred_element_type=f32) + b1_ref[...]
    h = h * pl.reciprocal(1.0 + jnp.exp(-h), approx=True)           # SiLU
    out = x1 + jnp.dot(h, w2_ref[...], preferred_element_type=f32)

    o_ref[...] = out


# ----------------------------------------------------------------------------
# Wrapper: BN folding, one-hot gather/scatter matrices, pallas_call.
# ----------------------------------------------------------------------------
def _fold_bn(gamma, beta, mean, var, eps=1e-5):
    s = gamma / jnp.sqrt(var + eps)
    t = beta - mean * s
    return s, t


def gt_forward(params, node_feats, edge_feats, edge_index):
    n, c = node_feats.shape
    e = edge_feats.shape[0]
    h_heads = params["num_heads"]
    assert c % h_heads == 0
    d = c // h_heads

    # Fold eval-mode BatchNorms into the following linears.
    s1n, t1n = _fold_bn(*params["bn1_node"])
    s1e, t1e = _fold_bn(*params["bn1_edge"])
    s2, t2 = _fold_bn(*params["bn2_node"])

    wqkv = jnp.concatenate([params["wq"], params["wk"], params["wv"]], axis=1)
    wqkv_f = s1n[:, None] * wqkv                     # [C, 3C]
    bqkv = (t1n @ wqkv).reshape(1, -1)               # [1, 3C]
    we_f = s1e[:, None] * params["we"]               # [C, C]
    be = (t1e @ params["we"]).reshape(1, -1)         # [1, C]
    w1_f = s2[:, None] * params["w1"]                # [C, 2C]
    b1 = (t2 @ params["w1"]).reshape(1, -1)          # [1, 2C]
    bo = params["bo"].reshape(1, -1)                 # [1, C]

    # One-hot gather/scatter matrices (built outside the kernel).
    g_row = jax.nn.one_hot(edge_index[0], n, dtype=jnp.float32)     # [E, N]
    g_col = jax.nn.one_hot(edge_index[1], n, dtype=jnp.float32)     # [E, N]
    scat = g_col.T                                                  # [N, E]

    # Head-membership matrix: hsum[ch, head] = 1 iff ch belongs to that head.
    hsum = (jnp.arange(c)[:, None] // d ==
            jnp.arange(h_heads)[None, :]).astype(jnp.float32)       # [C, H]

    return pl.pallas_call(
        _gt_forward_kernel,
        out_shape=jax.ShapeDtypeStruct((n, c), jnp.float32),
    )(node_feats, edge_feats, g_row, g_col, scat, hsum,
      wqkv_f, bqkv, we_f, be,
      params["wo"], bo, w1_f, b1, params["w2"])


# ----------------------------------------------------------------------------
# Pure-JAX reference (mirrors the torch module, eval mode) for validation.
# ----------------------------------------------------------------------------
def reference_forward(params, node_feats, edge_feats, edge_index, eps=1e-5):
    def bn(x, p):
        gamma, beta, mean, var = p
        return (x - mean) / jnp.sqrt(var + eps) * gamma + beta

    n, c = node_feats.shape
    h_heads = params["num_heads"]
    d = c // h_heads
    xn = bn(node_feats, params["bn1_node"])
    en = bn(edge_feats, params["bn1_edge"])
    q = (xn @ params["wq"]).reshape(n, h_heads, d)
    k = (xn @ params["wk"]).reshape(n, h_heads, d)
    v = (xn @ params["wv"]).reshape(n, h_heads, d)
    ep = (en @ params["we"]).reshape(-1, h_heads, d)
    row, col = edge_index[0], edge_index[1]
    alpha = jnp.clip(k[row] * q[col] / math.sqrt(d), -5.0, 5.0) * ep
    alphax = jnp.exp(jnp.clip(alpha.sum(-1, keepdims=True), -5.0, 5.0))
    w_v = jnp.zeros((n, h_heads, d), jnp.float32).at[col].add(v[row] * alphax)
    z = jnp.zeros((n, h_heads, 1), jnp.float32).at[col].add(alphax)
    h_out = (w_v / (z + 1e-6)).reshape(n, c)
    x1 = node_feats + h_out @ params["wo"] + params["bo"]
    h = bn(x1, params["bn2_node"]) @ params["w1"]
    h = h * jax.nn.sigmoid(h)
    return x1 + h @ params["w2"]


# ----------------------------------------------------------------------------
# Deterministic parameter init.
# TODO(synk): torch uses glorot_orthogonal init; plain uniform here (init does
#             not change forward-pass semantics).
# ----------------------------------------------------------------------------
def init_params(key, c, h_heads):
    ks = jax.random.split(key, 12)

    def lin(k, fi, fo):
        b = 1.0 / math.sqrt(fi)
        return jax.random.uniform(k, (fi, fo), jnp.float32, -b, b)

    def bn_params(k):
        k1, k2, k3, k4 = jax.random.split(k, 4)
        gamma = 1.0 + 0.1 * jax.random.normal(k1, (c,), jnp.float32)
        beta = 0.1 * jax.random.normal(k2, (c,), jnp.float32)
        mean = 0.1 * jax.random.normal(k3, (c,), jnp.float32)
        var = 1.0 + 0.1 * jax.random.uniform(k4, (c,), jnp.float32)
        return (gamma, beta, mean, var)

    return dict(
        num_heads=h_heads,
        wq=lin(ks[0], c, c), wk=lin(ks[1], c, c), wv=lin(ks[2], c, c),
        we=lin(ks[3], c, c),
        wo=lin(ks[4], c, c), bo=jnp.zeros((c,), jnp.float32),
        w1=lin(ks[5], c, 2 * c), w2=lin(ks[6], 2 * c, c),
        bn1_node=bn_params(ks[7]),
        bn1_edge=bn_params(ks[8]),
        bn2_node=bn_params(ks[9]),
    )


if __name__ == "__main__":
    key = jax.random.PRNGKey(0)
    N, E, C, H = 16, 32, 32, 4          # nodes, edges, hidden channels, heads
    ks = jax.random.split(key, 6)

    params = init_params(ks[0], C, H)
    node_feats = jax.random.normal(ks[1], (N, C), jnp.float32)
    edge_feats = jax.random.normal(ks[2], (E, C), jnp.float32)
    src = jax.random.randint(ks[3], (E,), 0, N)
    dst = jax.random.randint(ks[4], (E,), 0, N)
    edge_index = jnp.stack([src, dst])  # [2, E]

    out = gt_forward(params, node_feats, edge_feats, edge_index)
    out = jax.block_until_ready(out)

    ref = reference_forward(params, node_feats, edge_feats, edge_index)
    assert out.shape == (N, C)
    rel = float(jnp.max(jnp.abs(out - ref)) / (jnp.max(jnp.abs(ref)) + 1e-6))
    assert rel < 5e-2, f"kernel/reference mismatch: rel={rel}"
    print("KERNEL_OK")
</pallas_src>

<mosaic_0001>
module attributes {stable_mosaic.version = 11 : i64} {
  func.func @_gt_forward_kernel(%arg0: memref<16x32xf32, #tpu.memory_space<vmem>>, %arg1: memref<32x32xf32, #tpu.memory_space<vmem>>, %arg2: memref<32x16xf32, #tpu.memory_space<vmem>>, %arg3: memref<32x16xf32, #tpu.memory_space<vmem>>, %arg4: memref<16x32xf32, #tpu.memory_space<vmem>>, %arg5: memref<32x4xf32, #tpu.memory_space<vmem>>, %arg6: memref<32x96xf32, #tpu.memory_space<vmem>>, %arg7: memref<1x96xf32, #tpu.memory_space<vmem>>, %arg8: memref<32x32xf32, #tpu.memory_space<vmem>>, %arg9: memref<1x32xf32, #tpu.memory_space<vmem>>, %arg10: memref<32x32xf32, #tpu.memory_space<vmem>>, %arg11: memref<1x32xf32, #tpu.memory_space<vmem>>, %arg12: memref<32x64xf32, #tpu.memory_space<vmem>>, %arg13: memref<1x64xf32, #tpu.memory_space<vmem>>, %arg14: memref<64x32xf32, #tpu.memory_space<vmem>>, %arg15: memref<16x32xf32, #tpu.memory_space<vmem>>) attributes {dimension_semantics = [], scalar_prefetch = 0 : i64, scratch_operands = 0 : i64, tpu.core_type = #tpu.core_type<tc>} {
    %c0 = arith.constant 0 : index
    %c0_0 = arith.constant 0 : index
    %0 = vector.load %arg0[%c0, %c0_0] : memref<16x32xf32, #tpu.memory_space<vmem>>, vector<16x32xf32>
    %c0_1 = arith.constant 0 : index
    %c0_2 = arith.constant 0 : index
    %1 = vector.load %arg1[%c0_1, %c0_2] : memref<32x32xf32, #tpu.memory_space<vmem>>, vector<32x32xf32>
    %c0_3 = arith.constant 0 : index
    %c0_4 = arith.constant 0 : index
    %2 = vector.load %arg6[%c0_3, %c0_4] : memref<32x96xf32, #tpu.memory_space<vmem>>, vector<32x96xf32>
    %cst = arith.constant dense<0.000000e+00> : vector<16x96xf32>
    %3 = tpu.matmul %0, %2, %cst {dimension_numbers = #tpu.dot_dimension_numbers<[1], [0], [0], [1], [0, 0, 1, 1], [], []>} : vector<16x32xf32>, vector<32x96xf32>, vector<16x96xf32> -> vector<16x96xf32>
    %c0_5 = arith.constant 0 : index
    %c0_6 = arith.constant 0 : index
    %4 = vector.load %arg7[%c0_5, %c0_6] : memref<1x96xf32, #tpu.memory_space<vmem>>, vector<1x96xf32>
    %5 = vector.broadcast %4 : vector<1x96xf32> to vector<16x96xf32>
    %6 = arith.addf %3, %5 : vector<16x96xf32>
    %7 = vector.extract_strided_slice %6 {offsets = [0, 0], sizes = [16, 32], strides = [1, 1]} : vector<16x96xf32> to vector<16x32xf32>
    %8 = vector.extract_strided_slice %6 {offsets = [0, 32], sizes = [16, 32], strides = [1, 1]} : vector<16x96xf32> to vector<16x32xf32>
    %9 = vector.extract_strided_slice %6 {offsets = [0, 64], sizes = [16, 32], strides = [1, 1]} : vector<16x96xf32> to vector<16x32xf32>
    %c0_7 = arith.constant 0 : index
    %c0_8 = arith.constant 0 : index
    %10 = vector.load %arg8[%c0_7, %c0_8] : memref<32x32xf32, #tpu.memory_space<vmem>>, vector<32x32xf32>
    %cst_9 = arith.constant dense<0.000000e+00> : vector<32x32xf32>
    %11 = tpu.matmul %1, %10, %cst_9 {dimension_numbers = #tpu.dot_dimension_numbers<[1], [0], [0], [1], [0, 0, 1, 1], [], []>} : vector<32x32xf32>, vector<32x32xf32>, vector<32x32xf32> -> vector<32x32xf32>
    %c0_10 = arith.constant 0 : index
    %c0_11 = arith.constant 0 : index
    %12 = vector.load %arg9[%c0_10, %c0_11] : memref<1x32xf32, #tpu.memory_space<vmem>>, vector<1x32xf32>
    %13 = vector.broadcast %12 : vector<1x32xf32> to vector<32x32xf32>
    %14 = arith.addf %11, %13 : vector<32x32xf32>
    %c0_12 = arith.constant 0 : index
    %c0_13 = arith.constant 0 : index
    %15 = vector.load %arg2[%c0_12, %c0_13] : memref<32x16xf32, #tpu.memory_space<vmem>>, vector<32x16xf32>
    %c0_14 = arith.constant 0 : index
    %c0_15 = arith.constant 0 : index
    %16 = vector.load %arg3[%c0_14, %c0_15] : memref<32x16xf32, #tpu.memory_space<vmem>>, vector<32x16xf32>
    %cst_16 = arith.constant dense<0.000000e+00> : vector<32x32xf32>
    %17 = tpu.matmul %15, %8, %cst_16 {dimension_numbers = #tpu.dot_dimension_numbers<[1], [0], [0], [1], [0, 0, 1, 1], [], []>} : vector<32x16xf32>, vector<16x32xf32>, vector<32x32xf32> -> vector<32x32xf32>
    %cst_17 = arith.constant dense<0.000000e+00> : vector<32x32xf32>
    %18 = tpu.matmul %16, %7, %cst_17 {dimension_numbers = #tpu.dot_dimension_numbers<[1], [0], [0], [1], [0, 0, 1, 1], [], []>} : vector<32x16xf32>, vector<16x32xf32>, vector<32x32xf32> -> vector<32x32xf32>
    %cst_18 = arith.constant dense<0.000000e+00> : vector<32x32xf32>
    %19 = tpu.matmul %15, %9, %cst_18 {dimension_numbers = #tpu.dot_dimension_numbers<[1], [0], [0], [1], [0, 0, 1, 1], [], []>} : vector<32x16xf32>, vector<16x32xf32>, vector<32x32xf32> -> vector<32x32xf32>
    %20 = arith.mulf %17, %18 : vector<32x32xf32>
    %cst_19 = arith.constant 0.353553385 : f32
    %21 = vector.broadcast %cst_19 : f32 to vector<32x32xf32>
    %22 = arith.mulf %20, %21 : vector<32x32xf32>
    %cst_20 = arith.constant -5.000000e+00 : f32
    %cst_21 = arith.constant 5.000000e+00 : f32
    %23 = vector.broadcast %cst_20 : f32 to vector<32x32xf32>
    %24 = arith.maximumf %23, %22 : vector<32x32xf32>
    %25 = vector.broadcast %cst_21 : f32 to vector<32x32xf32>
    %26 = arith.minimumf %25, %24 : vector<32x32xf32>
    %27 = arith.mulf %26, %14 : vector<32x32xf32>
    %c0_22 = arith.constant 0 : index
    %c0_23 = arith.constant 0 : index
    %28 = vector.load %arg5[%c0_22, %c0_23] : memref<32x4xf32, #tpu.memory_space<vmem>>, vector<32x4xf32>
    %cst_24 = arith.constant dense<0.000000e+00> : vector<32x4xf32>
    %29 = tpu.matmul %27, %28, %cst_24 {dimension_numbers = #tpu.dot_dimension_numbers<[1], [0], [0], [1], [0, 0, 1, 1], [], []>} : vector<32x32xf32>, vector<32x4xf32>, vector<32x4xf32> -> vector<32x4xf32>
    %cst_25 = arith.constant -5.000000e+00 : f32
    %cst_26 = arith.constant 5.000000e+00 : f32
    %30 = vector.broadcast %cst_25 : f32 to vector<32x4xf32>
    %31 = arith.maximumf %30, %29 : vector<32x4xf32>
    %32 = vector.broadcast %cst_26 : f32 to vector<32x4xf32>
    %33 = arith.minimumf %32, %31 : vector<32x4xf32>
    %34 = math.exp %33 : vector<32x4xf32>
    %cst_27 = arith.constant dense<0.000000e+00> : vector<32x32xf32>
    %35 = tpu.matmul %34, %28, %cst_27 {dimension_numbers = #tpu.dot_dimension_numbers<[1], [1], [0], [0], [0, 0, 1, 0], [], []>} : vector<32x4xf32>, vector<32x4xf32>, vector<32x32xf32> -> vector<32x32xf32>
    %36 = arith.mulf %19, %35 : vector<32x32xf32>
    %c0_28 = arith.constant 0 : index
    %c0_29 = arith.constant 0 : index
    %37 = vector.load %arg4[%c0_28, %c0_29] : memref<16x32xf32, #tpu.memory_space<vmem>>, vector<16x32xf32>
    %cst_30 = arith.constant dense<0.000000e+00> : vector<16x32xf32>
    %38 = tpu.matmul %37, %36, %cst_30 {dimension_numbers = #tpu.dot_dimension_numbers<[1], [0], [0], [1], [0, 0, 1, 1], [], []>} : vector<16x32xf32>, vector<32x32xf32>, vector<16x32xf32> -> vector<16x32xf32>
    %cst_31 = arith.constant dense<0.000000e+00> : vector<16x4xf32>
    %39 = tpu.matmul %37, %34, %cst_31 {dimension_numbers = #tpu.dot_dimension_numbers<[1], [0], [0], [1], [0, 0, 1, 1], [], []>} : vector<16x32xf32>, vector<32x4xf32>, vector<16x4xf32> -> vector<16x4xf32>
    %cst_32 = arith.constant dense<0.000000e+00> : vector<16x32xf32>
    %40 = tpu.matmul %39, %28, %cst_32 {dimension_numbers = #tpu.dot_dimension_numbers<[1], [1], [0], [0], [0, 0, 1, 0], [], []>} : vector<16x4xf32>, vector<32x4xf32>, vector<16x32xf32> -> vector<16x32xf32>
    %cst_33 = arith.constant 9.99999997E-7 : f32
    %41 = vector.broadcast %cst_33 : f32 to vector<16x32xf32>
    %42 = arith.addf %40, %41 : vector<16x32xf32>
    %43 = tpu.reciprocal %42 {approx = true} : vector<16x32xf32> -> vector<16x32xf32>
    %44 = arith.mulf %38, %43 : vector<16x32xf32>
    %c0_34 = arith.constant 0 : index
    %c0_35 = arith.constant 0 : index
    %45 = vector.load %arg10[%c0_34, %c0_35] : memref<32x32xf32, #tpu.memory_space<vmem>>, vector<32x32xf32>
    %cst_36 = arith.constant dense<0.000000e+00> : vector<16x32xf32>
    %46 = tpu.matmul %44, %45, %cst_36 {dimension_numbers = #tpu.dot_dimension_numbers<[1], [0], [0], [1], [0, 0, 1, 1], [], []>} : vector<16x32xf32>, vector<32x32xf32>, vector<16x32xf32> -> vector<16x32xf32>
    %47 = arith.addf %0, %46 : vector<16x32xf32>
    %c0_37 = arith.constant 0 : index
    %c0_38 = arith.constant 0 : index
    %48 = vector.load %arg11[%c0_37, %c0_38] : memref<1x32xf32, #tpu.memory_space<vmem>>, vector<1x32xf32>
    %49 = vector.broadcast %48 : vector<1x32xf32> to vector<16x32xf32>
    %50 = arith.addf %47, %49 : vector<16x32xf32>
    %c0_39 = arith.constant 0 : index
    %c0_40 = arith.constant 0 : index
    %51 = vector.load %arg12[%c0_39, %c0_40] : memref<32x64xf32, #tpu.memory_space<vmem>>, vector<32x64xf32>
    %cst_41 = arith.constant dense<0.000000e+00> : vector<16x64xf32>
    %52 = tpu.matmul %50, %51, %cst_41 {dimension_numbers = #tpu.dot_dimension_numbers<[1], [0], [0], [1], [0, 0, 1, 1], [], []>} : vector<16x32xf32>, vector<32x64xf32>, vector<16x64xf32> -> vector<16x64xf32>
    %c0_42 = arith.constant 0 : index
    %c0_43 = arith.constant 0 : index
    %53 = vector.load %arg13[%c0_42, %c0_43] : memref<1x64xf32, #tpu.memory_space<vmem>>, vector<1x64xf32>
    %54 = vector.broadcast %53 : vector<1x64xf32> to vector<16x64xf32>
    %55 = arith.addf %52, %54 : vector<16x64xf32>
    %cst_44 = arith.constant 0.000000e+00 : f32
    %56 = vector.broadcast %cst_44 : f32 to vector<16x64xf32>
    %57 = arith.subf %56, %55 : vector<16x64xf32>
    %58 = math.exp %57 : vector<16x64xf32>
    %cst_45 = arith.constant 1.000000e+00 : f32
    %59 = vector.broadcast %cst_45 : f32 to vector<16x64xf32>
    %60 = arith.addf %59, %58 : vector<16x64xf32>
    %61 = tpu.reciprocal %60 {approx = true} : vector<16x64xf32> -> vector<16x64xf32>
    %62 = arith.mulf %55, %61 : vector<16x64xf32>
    %c0_46 = arith.constant 0 : index
    %c0_47 = arith.constant 0 : index
    %63 = vector.load %arg14[%c0_46, %c0_47] : memref<64x32xf32, #tpu.memory_space<vmem>>, vector<64x32xf32>
    %cst_48 = arith.constant dense<0.000000e+00> : vector<16x32xf32>
    %64 = tpu.matmul %62, %63, %cst_48 {dimension_numbers = #tpu.dot_dimension_numbers<[1], [0], [0], [1], [0, 0, 1, 1], [], []>} : vector<16x64xf32>, vector<64x32xf32>, vector<16x32xf32> -> vector<16x32xf32>
    %65 = arith.addf %50, %64 : vector<16x32xf32>
    %c0_49 = arith.constant 0 : index
    %c0_50 = arith.constant 0 : index
    %66 = vector.load %arg15[%c0_49, %c0_50] : memref<16x32xf32, #tpu.memory_space<vmem>>, vector<16x32xf32>
    tpu.vector_store %arg15[%c0_49, %c0_50], %65 {strides = array<i32>} : memref<16x32xf32, #tpu.memory_space<vmem>>, vector<16x32xf32>,
    return
  }
}

</mosaic_0001>

<llo_original>
// kernel: tpu_custom_call.1
$region0: #{tpu_custom_call.1}
  #allocation0 [shape = 'u32[]', space=smem, size = 0x4, offset = 0x4, fixed_abs, tag = 'smem constant byte address 0x4 - core index']
  #allocation1 [shape = 'u32[144,128]{1,0:T(1,128)}', space=vmem, size = 0x12000, scoped, tag = 'internal scratch']
  %s0 = inlined_call_operand.vmem [shape: f32[16,32], index: 0, kind: input, shape index: {}]
  %s1 = inlined_call_operand.vmem [shape: f32[32,32], index: 1, kind: input, shape index: {}]
  %s2 = inlined_call_operand.vmem [shape: f32[32,16], index: 2, kind: input, shape index: {}]
  %s3 = inlined_call_operand.vmem [shape: f32[32,16], index: 3, kind: input, shape index: {}]
  %s4 = inlined_call_operand.hbm [shape: f32[16,32], index: 4, kind: input, shape index: {}]
  %s5 = inlined_call_operand.vmem [shape: f32[32,4], index: 5, kind: input, shape index: {}]
  %s6 = inlined_call_operand.vmem [shape: f32[32,96], index: 6, kind: input, shape index: {}]
  %s7 = inlined_call_operand.vmem [shape: f32[1,96], index: 7, kind: input, shape index: {}]
  %s8 = inlined_call_operand.vmem [shape: f32[32,32], index: 8, kind: input, shape index: {}]
  %s9 = inlined_call_operand.vmem [shape: f32[1,32], index: 9, kind: input, shape index: {}]
  %s10 = inlined_call_operand.vmem [shape: f32[32,32], index: 10, kind: input, shape index: {}]
  %s11 = inlined_call_operand.vmem [shape: f32[1,32], index: 11, kind: input, shape index: {}]
  %s12 = inlined_call_operand.vmem [shape: f32[32,64], index: 12, kind: input, shape index: {}]
  %s13 = inlined_call_operand.vmem [shape: f32[1,64], index: 13, kind: input, shape index: {}]
  %s14 = inlined_call_operand.vmem [shape: f32[64,32], index: 14, kind: input, shape index: {}]
  %s15 = inlined_call_operand.hbm [shape: f32[16,32], index: 15, kind: output, shape index: {}]
  %s16 = sld [smem:[#allocation0]]
  $region74: #{tpu_custom_call.1} parent=0
    _
  %s18 = ssub.s32 1, %s16
  %s19 = scalar_select 0, %s18, %s16
  $region1: #{tpu_custom_call.1} parent=0
    #allocation2 [shape = 'u8[8192]{0}', space=vmem, size = 0x2000, scoped, tag = 'input window, operand 4, single buffered']
    #allocation3 [shape = 's32[1]{0}', space=sflag, size = 0x4, scoped, tag = 'scoped memory for tpu_custom_call.1']
    #allocation4 [shape = 's32[1]{0}', space=sflag, size = 0x4, scoped, tag = 'scoped memory for tpu_custom_call.1']
    #allocation5 [shape = 'u8[8192]{0}', space=vmem, size = 0x2000, scoped, tag = 'output window, operand 0, single buffered']
    %20 = vsyncpa [#allocation3], 0
    %21 = vsyncpa [#allocation4], 0
    // Predicated region
    $region2: #{tpu_custom_call.1} parent=1 // pred_check
      _
    $region3: #{tpu_custom_call.1} parent=1 // pred_check_branch
      %23 = sbr.rel (0) target = $region5
    $region4: #{tpu_custom_call.1} parent=1 // pred_region
      _
    $region5: #{tpu_custom_call.1} parent=1 // pred_fallthru
      _
    // Predicated region
    $region6: #{tpu_custom_call.1} parent=1 // pred_check
      _
    $region7: #{tpu_custom_call.1} parent=1 // pred_check_branch
      %25 = sbr.rel (0) target = $region9
    $region8: #{tpu_custom_call.1} parent=1 // pred_region
      _
    $region9: #{tpu_custom_call.1} parent=1 // pred_fallthru
      _
    // Predicated region
    $region10: #{tpu_custom_call.1} parent=1 // pred_check
      _
    $region11: #{tpu_custom_call.1} parent=1 // pred_check_branch
      %27 = sbr.rel (0) target = $region13
    $region12: #{tpu_custom_call.1} parent=1 // pred_region
      _
    $region13: #{tpu_custom_call.1} parent=1 // pred_fallthru
      _
    // Predicated region
    $region14: #{tpu_custom_call.1} parent=1 // pred_check
      _
    $region15: #{tpu_custom_call.1} parent=1 // pred_check_branch
      %29 = sbr.rel (0) target = $region17
    $region16: #{tpu_custom_call.1} parent=1 // pred_region
      _
    $region17: #{tpu_custom_call.1} parent=1 // pred_fallthru
      _
    // Predicated region
    $region18: #{tpu_custom_call.1} parent=1 // pred_check
      _
    $region19: #{tpu_custom_call.1} parent=1 // pred_check_branch
      %31 = sbr.rel (0) target = $region21
    $region20: #{tpu_custom_call.1} parent=1 // pred_region
      %s33 = ssub.s32 256, 256
      %34 = vsyncadd [#allocation3], %s33
      %s35 = sshll.u32 [#allocation2], 4
      %s36 = int_to_ptr.vmem [resolvable:$true] %s35
      %41 = dma.hbm_to_vmem [thread:$0]  %s4, 256, %s36, [#allocation3], 128, 128, 8
    $region21: #{tpu_custom_call.1} parent=1 // pred_fallthru
      _
    // Predicated region
    $region22: #{tpu_custom_call.1} parent=1 // pred_check
      _
    $region23: #{tpu_custom_call.1} parent=1 // pred_check_branch
      %43 = sbr.rel (0) target = $region25
    $region24: #{tpu_custom_call.1} parent=1 // pred_region
      _
    $region25: #{tpu_custom_call.1} parent=1 // pred_fallthru
      _
    // Predicated region
    $region26: #{tpu_custom_call.1} parent=1 // pred_check
      _
    $region27: #{tpu_custom_call.1} parent=1 // pred_check_branch
      %45 = sbr.rel (0) target = $region29
    $region28: #{tpu_custom_call.1} parent=1 // pred_region
      _
    $region29: #{tpu_custom_call.1} parent=1 // pred_fallthru
      _
    // Predicated region
    $region30: #{tpu_custom_call.1} parent=1 // pred_check
      _
    $region31: #{tpu_custom_call.1} parent=1 // pred_check_branch
      %47 = sbr.rel (0) target = $region33
    $region32: #{tpu_custom_call.1} parent=1 // pred_region
      _
    $region33: #{tpu_custom_call.1} parent=1 // pred_fallthru
      _
    // Predicated region
    $region34: #{tpu_custom_call.1} parent=1 // pred_check
      _
    $region35: #{tpu_custom_call.1} parent=1 // pred_check_branch
      %49 = sbr.rel (0) target = $region37
    $region36: #{tpu_custom_call.1} parent=1 // pred_region
      _
    $region37: #{tpu_custom_call.1} parent=1 // pred_fallthru
      _
    // Predicated region
    $region38: #{tpu_custom_call.1} parent=1 // pred_check
      _
    $region39: #{tpu_custom_call.1} parent=1 // pred_check_branch
      %51 = sbr.rel (0) target = $region41
    $region40: #{tpu_custom_call.1} parent=1 // pred_region
      _
    $region41: #{tpu_custom_call.1} parent=1 // pred_fallthru
      _
    // Predicated region
    $region42: #{tpu_custom_call.1} parent=1 // pred_check
      _
    $region43: #{tpu_custom_call.1} parent=1 // pred_check_branch
      %53 = sbr.rel (0) target = $region45
    $region44: #{tpu_custom_call.1} parent=1 // pred_region
      _
    $region45: #{tpu_custom_call.1} parent=1 // pred_fallthru
      _
    // Predicated region
    $region46: #{tpu_custom_call.1} parent=1 // pred_check
      _
    $region47: #{tpu_custom_call.1} parent=1 // pred_check_branch
      %55 = sbr.rel (0) target = $region49
    $region48: #{tpu_custom_call.1} parent=1 // pred_region
      _
    $region49: #{tpu_custom_call.1} parent=1 // pred_fallthru
      _
    // Predicated region
    $region50: #{tpu_custom_call.1} parent=1 // pred_check
      _
    $region51: #{tpu_custom_call.1} parent=1 // pred_check_branch
      %57 = sbr.rel (0) target = $region53
    $region52: #{tpu_custom_call.1} parent=1 // pred_region
      _
    $region53: #{tpu_custom_call.1} parent=1 // pred_fallthru
      _
    // Predicated region
    $region54: #{tpu_custom_call.1} parent=1 // pred_check
      _
    $region55: #{tpu_custom_call.1} parent=1 // pred_check_branch
      %59 = sbr.rel (0) target = $region57
    $region56: #{tpu_custom_call.1} parent=1 // pred_region
      _
    $region57: #{tpu_custom_call.1} parent=1 // pred_fallthru
      _
    // Predicated region
    $region58: #{tpu_custom_call.1} parent=1 // pred_check
      _
    $region59: #{tpu_custom_call.1} parent=1 // pred_check_branch
      %61 = sbr.rel (0) target = $region61
    $region60: #{tpu_custom_call.1} parent=1 // pred_region
      _
    $region61: #{tpu_custom_call.1} parent=1 // pred_fallthru
      _
    // Predicated region
    $region62: #{tpu_custom_call.1} parent=1 // pred_check
      _
    $region63: #{tpu_custom_call.1} parent=1 // pred_check_branch
      %63 = sbr.rel (0) target = $region65
    $region64: #{tpu_custom_call.1} parent=1 // pred_region
      %64 = dma.done [#allocation3], 256
    $region65: #{tpu_custom_call.1} parent=1 // pred_fallthru
      _
    %v65 = vld [vmem:[%s0] sm:$0xff]
    %v66 = vld [vmem:[%s0 + $0x8] sm:$0xff]
    %v67 = vld [vmem:[%s1] sm:$0xff]
    %v68 = vld [vmem:[%s1 + $0x8] sm:$0xff]
    %v69 = vld [vmem:[%s1 + $0x10] sm:$0xff]
    %v70 = vld [vmem:[%s1 + $0x18] sm:$0xff]
    %v71 = vld [vmem:[%s6] sm:$0xff]
    %v72 = vld [vmem:[%s6 + $0x8] sm:$0xff]
    %v73 = vld [vmem:[%s6 + $0x10] sm:$0xff]
    %v74 = vld [vmem:[%s6 + $0x18] sm:$0xff]
    %v75 = vld [vmem:[%s7] sm:$0x1]
    %v77 = vlaneseq
    %v78 = vshrl.u32 %v77, 7
    %v79 = vsub.s32 0, %v78
    %v80 = vrot.slane %v75, %v79
    %vm82 = vcmask 261120
    %v84 = vsel %vm82, %v65, 0
    %v87 = vsel %vm82, %v66, 0
    %89 = vmatprep.subr.mxu0 0.0
    %90 = vmatpush1.msra.mxu0 %v71
    %91 = vmatprep.subr.mxu0 0.0
    %92 = vmatpush1.msra.mxu0 %v72
    %93 = vmatprep.subr.mxu0 0.0
    %94 = vmatpush1.msra.mxu0 %v73
    %95 = vmatprep.subr.mxu0 0.0
    %96 = vmatpush1.msra.mxu0 %v74
    %97 = vmatprep.subr.mxu0 0.0
    %98 = vmatpush1.msra.mxu0 0.0
    %99 = vmatprep.subr.mxu0 0.0
    %100 = vmatpush1.msra.mxu0 0.0
    %101 = vmatprep.subr.mxu0 0.0
    %102 = vmatpush1.msra.mxu0 0.0
    %103 = vmatprep.subr.mxu0 0.0
    %104 = vmatpush1.msra.mxu0 0.0
    %105 = vmatprep.subr.mxu0 0.0
    %106 = vmatpush1.msra.mxu0 0.0
    %107 = vmatprep.subr.mxu0 0.0
    %108 = vmatpush1.msra.mxu0 0.0
    %109 = vmatprep.subr.mxu0 0.0
    %110 = vmatpush1.msra.mxu0 0.0
    %111 = vmatprep.subr.mxu0 0.0
    %112 = vmatpush1.msra.mxu0 0.0
    %113 = vmatprep.subr.mxu0 0.0
    %114 = vmatpush1.msra.mxu0 0.0
    %115 = vmatprep.subr.mxu0 0.0
    %116 = vmatpush1.msra.mxu0 0.0
    %117 = vmatprep.subr.mxu0 0.0
    %118 = vmatpush1.msra.mxu0 0.0
    %119 = vmatprep.subr.mxu0 0.0
    %120 = vmatpush1.msra.mxu0 0.0
    %121 = vmatprep.subr.mxu0 0.0
    %122 = vmatpush1.msra.mxu0 0.0
    %123 = vmatprep.subr.mxu0 0.0
    %124 = vmatpush1.msra.mxu0 0.0
    %125 = vmatprep.subr.mxu0 0.0
    %126 = vmatpush1.msra.mxu0 0.0
    %127 = vmatprep.subr.mxu0 0.0
    %128 = vmatpush1.msra.mxu0 0.0
    %129 = vmatprep.subr.mxu0 0.0
    %130 = vmatpush1.msra.mxu0 0.0
    %131 = vmatprep.subr.mxu0 0.0
    %132 = vmatpush1.msra.mxu0 0.0
    %133 = vmatprep.subr.mxu0 0.0
    %134 = vmatpush1.msra.mxu0 0.0
    %135 = vmatprep.subr.mxu0 0.0
    %136 = vmatpush1.msra.mxu0 0.0
    %137 = vmatprep.subr.mxu0 0.0
    %138 = vmatpush1.msra.mxu0 0.0
    %139 = vmatprep.subr.mxu0 0.0
    %140 = vmatpush1.msra.mxu0 0.0
    %141 = vmatprep.subr.mxu0 0.0
    %142 = vmatpush1.msra.mxu0 0.0
    %143 = vmatprep.subr.mxu0 0.0
    %144 = vmatpush1.msra.mxu0 0.0
    %145 = vmatprep.subr.mxu0 0.0
    %146 = vmatpush1.msra.mxu0 0.0
    %147 = vmatprep.subr.mxu0 0.0
    %148 = vmatpush1.msra.mxu0 0.0
    %149 = vmatprep.subr.mxu0 0.0
    %150 = vmatpush1.msra.mxu0 0.0
    %151 = vmatprep.subr.mxu0 0.0
    %152 = vmatpush1.msra.mxu0 0.0
    %153 = vmatprep.mubr.f32.mxu0 0.0
    %154 = vmatmul.mubr.f32.gmra.mrb[0].mxu0 %v84
    %v155 = vpop.f32.mrb[0].mxu0
    %v156 = vadd.f32 %v80, %v155
    %v157 = vpop.f32.mrb[0].mxu0
    %158 = vmatprep.mubr.f32.mxu0 0.0
    %159 = vmatmul.mubr.f32.gmra.mrb[0].mxu0 %v87
    %v160 = vpop.f32.mrb[0].mxu0
    %v161 = vadd.f32 %v80, %v160
    %v162 = vpop.f32.mrb[0].mxu0
    %163 = vdwg.mxu0
    %v164 = vld [vmem:[%s8] sm:$0xff]
    %v165 = vld [vmem:[%s8 + $0x8] sm:$0xff]
    %v166 = vld [vmem:[%s8 + $0x10] sm:$0xff]
    %v167 = vld [vmem:[%s8 + $0x18] sm:$0xff]
    %v168 = vld [vmem:[%s9] sm:$0x1]
    %v170 = vlaneseq
    %v171 = vshrl.u32 %v170, 7
    %v172 = vsub.s32 0, %v171
    %v173 = vrot.slane %v168, %v172
    %v176 = vsel %vm82, %v67, 0
    %v179 = vsel %vm82, %v68, 0
    %v182 = vsel %vm82, %v69, 0
    %v185 = vsel %vm82, %v70, 0
    %187 = vmatprep.subr.mxu0 0.0
    %188 = vmatpush1.msra.mxu0 %v164
    %189 = vmatprep.subr.mxu0 0.0
    %190 = vmatpush1.msra.mxu0 %v165
    %191 = vmatprep.subr.mxu0 0.0
    %192 = vmatpush1.msra.mxu0 %v166
    %193 = vmatprep.subr.mxu0 0.0
    %194 = vmatpush1.msra.mxu0 %v167
    %195 = vmatprep.subr.mxu0 0.0
    %196 = vmatpush1.msra.mxu0 0.0
    %197 = vmatprep.subr.mxu0 0.0
    %198 = vmatpush1.msra.mxu0 0.0
    %199 = vmatprep.subr.mxu0 0.0
    %200 = vmatpush1.msra.mxu0 0.0
    %201 = vmatprep.subr.mxu0 0.0
    %202 = vmatpush1.msra.mxu0 0.0
    %203 = vmatprep.subr.mxu0 0.0
    %204 = vmatpush1.msra.mxu0 0.0
    %205 = vmatprep.subr.mxu0 0.0
    %206 = vmatpush1.msra.mxu0 0.0
    %207 = vmatprep.subr.mxu0 0.0
    %208 = vmatpush1.msra.mxu0 0.0
    %209 = vmatprep.subr.mxu0 0.0
    %210 = vmatpush1.msra.mxu0 0.0
    %211 = vmatprep.subr.mxu0 0.0
    %212 = vmatpush1.msra.mxu0 0.0
    %213 = vmatprep.subr.mxu0 0.0
    %214 = vmatpush1.msra.mxu0 0.0
    %215 = vmatprep.subr.mxu0 0.0
    %216 = vmatpush1.msra.mxu0 0.0
    %217 = vmatprep.subr.mxu0 0.0
    %218 = vmatpush1.msra.mxu0 0.0
    %219 = vmatprep.subr.mxu0 0.0
    %220 = vmatpush1.msra.mxu0 0.0
    %221 = vmatprep.subr.mxu0 0.0
    %222 = vmatpush1.msra.mxu0 0.0
    %223 = vmatprep.subr.mxu0 0.0
    %224 = vmatpush1.msra.mxu0 0.0
    %225 = vmatprep.subr.mxu0 0.0
    %226 = vmatpush1.msra.mxu0 0.0
    %227 = vmatprep.subr.mxu0 0.0
    %228 = vmatpush1.msra.mxu0 0.0
    %229 = vmatprep.subr.mxu0 0.0
    %230 = vmatpush1.msra.mxu0 0.0
    %231 = vmatprep.subr.mxu0 0.0
    %232 = vmatpush1.msra.mxu0 0.0
    %233 = vmatprep.subr.mxu0 0.0
    %234 = vmatpush1.msra.mxu0 0.0
    %235 = vmatprep.subr.mxu0 0.0
    %236 = vmatpush1.msra.mxu0 0.0
    %237 = vmatprep.subr.mxu0 0.0
    %238 = vmatpush1.msra.mxu0 0.0
    %239 = vmatprep.subr.mxu0 0.0
    %240 = vmatpush1.msra.mxu0 0.0
    %241 = vmatprep.subr.mxu0 0.0
    %242 = vmatpush1.msra.mxu0 0.0
    %243 = vmatprep.subr.mxu0 0.0
    %244 = vmatpush1.msra.mxu0 0.0
    %245 = vmatprep.subr.mxu0 0.0
    %246 = vmatpush1.msra.mxu0 0.0
    %247 = vmatprep.subr.mxu0 0.0
    %248 = vmatpush1.msra.mxu0 0.0
    %249 = vmatprep.subr.mxu0 0.0
    %250 = vmatpush1.msra.mxu0 0.0
    %251 = vmatprep.mubr.f32.mxu0 0.0
    %252 = vmatmul.mubr.f32.gmra.mrb[0].mxu0 %v176
    %v253 = vpop.f32.mrb[0].mxu0
    %v254 = vadd.f32 %v173, %v253
    %v255 = vpop.f32.mrb[0].mxu0
    %256 = vmatprep.mubr.f32.mxu0 0.0
    %257 = vmatmul.mubr.f32.gmra.mrb[0].mxu0 %v179
    %v258 = vpop.f32.mrb[0].mxu0
    %v259 = vadd.f32 %v173, %v258
    %v260 = vpop.f32.mrb[0].mxu0
    %261 = vmatprep.mubr.f32.mxu0 0.0
    %262 = vmatmul.mubr.f32.gmra.mrb[0].mxu0 %v182
    %v263 = vpop.f32.mrb[0].mxu0
    %v264 = vadd.f32 %v173, %v263
    %v265 = vpop.f32.mrb[0].mxu0
    %266 = vmatprep.mubr.f32.mxu0 0.0
    %267 = vmatmul.mubr.f32.gmra.mrb[0].mxu0 %v185
    %v268 = vpop.f32.mrb[0].mxu0
    %v269 = vadd.f32 %v173, %v268
    %v270 = vpop.f32.mrb[0].mxu0
    %271 = vdwg.mxu0
    %v272 = vld [vmem:[%s2] sm:$0xff]
    %v273 = vld [vmem:[%s2 + $0x8] sm:$0xff]
    %v274 = vld [vmem:[%s2 + $0x10] sm:$0xff]
    %v275 = vld [vmem:[%s2 + $0x18] sm:$0xff]
    %v276 = vld [vmem:[%s3] sm:$0xff]
    %v277 = vld [vmem:[%s3 + $0x8] sm:$0xff]
    %v278 = vld [vmem:[%s3 + $0x10] sm:$0xff]
    %v279 = vld [vmem:[%s3 + $0x18] sm:$0xff]
    %282 = vrot.lane.b32.xlu0 %v156, 96
    %v283 = vpop.permute.xlu0 %282
    %284 = vrot.lane.b32.xlu0 %v161, 96
    %v285 = vpop.permute.xlu0 %284
    %vm288 = vcmask 130048
    %v290 = vsel %vm288, %v272, 0
    %v293 = vsel %vm288, %v273, 0
    %v296 = vsel %vm288, %v274, 0
    %v299 = vsel %vm288, %v275, 0
    %301 = vmatprep.subr.mxu0 0.0
    %302 = vmatpush1.msra.mxu0 %v283
    %303 = vmatprep.subr.mxu0 0.0
    %304 = vmatpush1.msra.mxu0 %v285
    %305 = vmatprep.subr.mxu0 0.0
    %306 = vmatpush1.msra.mxu0 0.0
    %307 = vmatprep.subr.mxu0 0.0
    %308 = vmatpush1.msra.mxu0 0.0
    %309 = vmatprep.subr.mxu0 0.0
    %310 = vmatpush1.msra.mxu0 0.0
    %311 = vmatprep.subr.mxu0 0.0
    %312 = vmatpush1.msra.mxu0 0.0
    %313 = vmatprep.subr.mxu0 0.0
    %314 = vmatpush1.msra.mxu0 0.0
    %315 = vmatprep.subr.mxu0 0.0
    %316 = vmatpush1.msra.mxu0 0.0
    %317 = vmatprep.subr.mxu0 0.0
    %318 = vmatpush1.msra.mxu0 0.0
    %319 = vmatprep.subr.mxu0 0.0
    %320 = vmatpush1.msra.mxu0 0.0
    %321 = vmatprep.subr.mxu0 0.0
    %322 = vmatpush1.msra.mxu0 0.0
    %323 = vmatprep.subr.mxu0 0.0
    %324 = vmatpush1.msra.mxu0 0.0
    %325 = vmatprep.subr.mxu0 0.0
    %326 = vmatpush1.msra.mxu0 0.0
    %327 = vmatprep.subr.mxu0 0.0
    %328 = vmatpush1.msra.mxu0 0.0
    %329 = vmatprep.subr.mxu0 0.0
    %330 = vmatpush1.msra.mxu0 0.0
    %331 = vmatprep.subr.mxu0 0.0
    %332 = vmatpush1.msra.mxu0 0.0
    %333 = vmatprep.subr.mxu0 0.0
    %334 = vmatpush1.msra.mxu0 0.0
    %335 = vmatprep.subr.mxu0 0.0
    %336 = vmatpush1.msra.mxu0 0.0
    %337 = vmatprep.subr.mxu0 0.0
    %338 = vmatpush1.msra.mxu0 0.0
    %339 = vmatprep.subr.mxu0 0.0
    %340 = vmatpush1.msra.mxu0 0.0
    %341 = vmatprep.subr.mxu0 0.0
    %342 = vmatpush1.msra.mxu0 0.0
    %343 = vmatprep.subr.mxu0 0.0
    %344 = vmatpush1.msra.mxu0 0.0
    %345 = vmatprep.subr.mxu0 0.0
    %346 = vmatpush1.msra.mxu0 0.0
    %347 = vmatprep.subr.mxu0 0.0
    %348 = vmatpush1.msra.mxu0 0.0
    %349 = vmatprep.subr.mxu0 0.0
    %350 = vmatpush1.msra.mxu0 0.0
    %351 = vmatprep.subr.mxu0 0.0
    %352 = vmatpush1.msra.mxu0 0.0
    %353 = vmatprep.subr.mxu0 0.0
    %354 = vmatpush1.msra.mxu0 0.0
    %355 = vmatprep.subr.mxu0 0.0
    %356 = vmatpush1.msra.mxu0 0.0
    %357 = vmatprep.subr.mxu0 0.0
    %358 = vmatpush1.msra.mxu0 0.0
    %359 = vmatprep.subr.mxu0 0.0
    %360 = vmatpush1.msra.mxu0 0.0
    %361 = vmatprep.subr.mxu0 0.0
    %362 = vmatpush1.msra.mxu0 0.0
    %363 = vmatprep.subr.mxu0 0.0
    %364 = vmatpush1.msra.mxu0 0.0
    %365 = vmatprep.mubr.f32.mxu0 0.0
    %366 = vmatmul.mubr.f32.gmra.mrb[0].mxu0 %v290
    %v367 = vpop.f32.mrb[0].mxu0
    %v368 = vadd.f32 0.0, %v367
    %v369 = vpop.f32.mrb[0].mxu0
    %370 = vmatprep.mubr.f32.mxu0 0.0
    %371 = vmatmul.mubr.f32.gmra.mrb[0].mxu0 %v293
    %v372 = vpop.f32.mrb[0].mxu0
    %v373 = vadd.f32 0.0, %v372
    %v374 = vpop.f32.mrb[0].mxu0
    %375 = vmatprep.mubr.f32.mxu0 0.0
    %376 = vmatmul.mubr.f32.gmra.mrb[0].mxu0 %v296
    %v377 = vpop.f32.mrb[0].mxu0
    %v378 = vadd.f32 0.0, %v377
    %v379 = vpop.f32.mrb[0].mxu0
    %380 = vmatprep.mubr.f32.mxu0 0.0
    %381 = vmatmul.mubr.f32.gmra.mrb[0].mxu0 %v299
    %v382 = vpop.f32.mrb[0].mxu0
    %v383 = vadd.f32 0.0, %v382
    %v384 = vpop.f32.mrb[0].mxu0
    %385 = vdwg.mxu0
    %v387 = vsel %vm288, %v276, 0
    %v390 = vsel %vm288, %v277, 0
    %v393 = vsel %vm288, %v278, 0
    %v396 = vsel %vm288, %v279, 0
    %398 = vmatprep.subr.mxu0 0.0
    %399 = vmatpush1.msra.mxu0 %v156
    %400 = vmatprep.subr.mxu0 0.0
    %401 = vmatpush1.msra.mxu0 %v161
    %402 = vmatprep.subr.mxu0 0.0
    %403 = vmatpush1.msra.mxu0 0.0
    %404 = vmatprep.subr.mxu0 0.0
    %405 = vmatpush1.msra.mxu0 0.0
    %406 = vmatprep.subr.mxu0 0.0
    %407 = vmatpush1.msra.mxu0 0.0
    %408 = vmatprep.subr.mxu0 0.0
    %409 = vmatpush1.msra.mxu0 0.0
    %410 = vmatprep.subr.mxu0 0.0
    %411 = vmatpush1.msra.mxu0 0.0
    %412 = vmatprep.subr.mxu0 0.0
    %413 = vmatpush1.msra.mxu0 0.0
    %414 = vmatprep.subr.mxu0 0.0
    %415 = vmatpush1.msra.mxu0 0.0
    %416 = vmatprep.subr.mxu0 0.0
    %417 = vmatpush1.msra.mxu0 0.0
    %418 = vmatprep.subr.mxu0 0.0
    %419 = vmatpush1.msra.mxu0 0.0
    %420 = vmatprep.subr.mxu0 0.0
    %421 = vmatpush1.msra.mxu0 0.0
    %422 = vmatprep.subr.mxu0 0.0
    %423 = vmatpush1.msra.mxu0 0.0
    %424 = vmatprep.subr.mxu0 0.0
    %425 = vmatpush1.msra.mxu0 0.0
    %426 = vmatprep.subr.mxu0 0.0
    %427 = vmatpush1.msra.mxu0 0.0
    %428 = vmatprep.subr.mxu0 0.0
    %429 = vmatpush1.msra.mxu0 0.0
    %430 = vmatprep.subr.mxu0 0.0
    %431 = vmatpush1.msra.mxu0 0.0
    %432 = vmatprep.subr.mxu0 0.0
    %433 = vmatpush1.msra.mxu0 0.0
    %434 = vmatprep.subr.mxu0 0.0
    %435 = vmatpush1.msra.mxu0 0.0
    %436 = vmatprep.subr.mxu0 0.0
    %437 = vmatpush1.msra.mxu0 0.0
    %438 = vmatprep.subr.mxu0 0.0
    %439 = vmatpush1.msra.mxu0 0.0
    %440 = vmatprep.subr.mxu0 0.0
    %441 = vmatpush1.msra.mxu0 0.0
    %442 = vmatprep.subr.mxu0 0.0
    %443 = vmatpush1.msra.mxu0 0.0
    %444 = vmatprep.subr.mxu0 0.0
    %445 = vmatpush1.msra.mxu0 0.0
    %446 = vmatprep.subr.mxu0 0.0
    %447 = vmatpush1.msra.mxu0 0.0
    %448 = vmatprep.subr.mxu0 0.0
    %449 = vmatpush1.msra.mxu0 0.0
    %450 = vmatprep.subr.mxu0 0.0
    %451 = vmatpush1.msra.mxu0 0.0
    %452 = vmatprep.subr.mxu0 0.0
    %453 = vmatpush1.msra.mxu0 0.0
    %454 = vmatprep.subr.mxu0 0.0
    %455 = vmatpush1.msra.mxu0 0.0
    %456 = vmatprep.subr.mxu0 0.0
    %457 = vmatpush1.msra.mxu0 0.0
    %458 = vmatprep.subr.mxu0 0.0
    %459 = vmatpush1.msra.mxu0 0.0
    %460 = vmatprep.subr.mxu0 0.0
    %461 = vmatpush1.msra.mxu0 0.0
    %462 = vmatprep.mubr.f32.mxu0 0.0
    %463 = vmatmul.mubr.f32.gmra.mrb[0].mxu0 %v387
    %v464 = vpop.f32.mrb[0].mxu0
    %v465 = vadd.f32 0.0, %v464
    %v466 = vpop.f32.mrb[0].mxu0
    %467 = vmatprep.mubr.f32.mxu0 0.0
    %468 = vmatmul.mubr.f32.gmra.mrb[0].mxu0 %v390
    %v469 = vpop.f32.mrb[0].mxu0
    %v470 = vadd.f32 0.0, %v469
    %v471 = vpop.f32.mrb[0].mxu0
    %472 = vmatprep.mubr.f32.mxu0 0.0
    %473 = vmatmul.mubr.f32.gmra.mrb[0].mxu0 %v393
    %v474 = vpop.f32.mrb[0].mxu0
    %v475 = vadd.f32 0.0, %v474
    %v476 = vpop.f32.mrb[0].mxu0
    %477 = vmatprep.mubr.f32.mxu0 0.0
    %478 = vmatmul.mubr.f32.gmra.mrb[0].mxu0 %v396
    %v479 = vpop.f32.mrb[0].mxu0
    %v480 = vadd.f32 0.0, %v479
    %v481 = vpop.f32.mrb[0].mxu0
    %482 = vdwg.mxu0
    %483 = vrot.lane.b32.xlu0 %v156, 64
    %v484 = vpop.permute.xlu0 %483
    %485 = vrot.lane.b32.xlu0 %v161, 64
    %v486 = vpop.permute.xlu0 %485
    %489 = vmatprep.subr.mxu0 0.0
    %490 = vmatpush1.msra.mxu0 %v484
    %491 = vmatprep.subr.mxu0 0.0
    %492 = vmatpush1.msra.mxu0 %v486
    %493 = vmatprep.subr.mxu0 0.0
    %494 = vmatpush1.msra.mxu0 0.0
    %495 = vmatprep.subr.mxu0 0.0
    %496 = vmatpush1.msra.mxu0 0.0
    %497 = vmatprep.subr.mxu0 0.0
    %498 = vmatpush1.msra.mxu0 0.0
    %499 = vmatprep.subr.mxu0 0.0
    %500 = vmatpush1.msra.mxu0 0.0
    %501 = vmatprep.subr.mxu0 0.0
    %502 = vmatpush1.msra.mxu0 0.0
    %503 = vmatprep.subr.mxu0 0.0
    %504 = vmatpush1.msra.mxu0 0.0
    %505 = vmatprep.subr.mxu0 0.0
    %506 = vmatpush1.msra.mxu0 0.0
    %507 = vmatprep.subr.mxu0 0.0
    %508 = vmatpush1.msra.mxu0 0.0
    %509 = vmatprep.subr.mxu0 0.0
    %510 = vmatpush1.msra.mxu0 0.0
    %511 = vmatprep.subr.mxu0 0.0
    %512 = vmatpush1.msra.mxu0 0.0
    %513 = vmatprep.subr.mxu0 0.0
    %514 = vmatpush1.msra.mxu0 0.0
    %515 = vmatprep.subr.mxu0 0.0
    %516 = vmatpush1.msra.mxu0 0.0
    %517 = vmatprep.subr.mxu0 0.0
    %518 = vmatpush1.msra.mxu0 0.0
    %519 = vmatprep.subr.mxu0 0.0
    %520 = vmatpush1.msra.mxu0 0.0
    %521 = vmatprep.subr.mxu0 0.0
    %522 = vmatpush1.msra.mxu0 0.0
    %523 = vmatprep.subr.mxu0 0.0
    %524 = vmatpush1.msra.mxu0 0.0
    %525 = vmatprep.subr.mxu0 0.0
    %526 = vmatpush1.msra.mxu0 0.0
    %527 = vmatprep.subr.mxu0 0.0
    %528 = vmatpush1.msra.mxu0 0.0
    %529 = vmatprep.subr.mxu0 0.0
    %530 = vmatpush1.msra.mxu0 0.0
    %531 = vmatprep.subr.mxu0 0.0
    %532 = vmatpush1.msra.mxu0 0.0
    %533 = vmatprep.subr.mxu0 0.0
    %534 = vmatpush1.msra.mxu0 0.0
    %535 = vmatprep.subr.mxu0 0.0
    %536 = vmatpush1.msra.mxu0 0.0
    %537 = vmatprep.subr.mxu0 0.0
    %538 = vmatpush1.msra.mxu0 0.0
    %539 = vmatprep.subr.mxu0 0.0
    %540 = vmatpush1.msra.mxu0 0.0
    %541 = vmatprep.subr.mxu0 0.0
    %542 = vmatpush1.msra.mxu0 0.0
    %543 = vmatprep.subr.mxu0 0.0
    %544 = vmatpush1.msra.mxu0 0.0
    %545 = vmatprep.subr.mxu0 0.0
    %546 = vmatpush1.msra.mxu0 0.0
    %547 = vmatprep.subr.mxu0 0.0
    %548 = vmatpush1.msra.mxu0 0.0
    %549 = vmatprep.subr.mxu0 0.0
    %550 = vmatpush1.msra.mxu0 0.0
    %551 = vmatprep.subr.mxu0 0.0
    %552 = vmatpush1.msra.mxu0 0.0
    %553 = vmatprep.mubr.f32.mxu0 0.0
    %554 = vmatmul.mubr.f32.gmra.mrb[0].mxu0 %v290
    %v555 = vpop.f32.mrb[0].mxu0
    %v556 = vadd.f32 0.0, %v555
    %v557 = vpop.f32.mrb[0].mxu0
    %558 = vmatprep.mubr.f32.mxu0 0.0
    %559 = vmatmul.mubr.f32.gmra.mrb[0].mxu0 %v293
    %v560 = vpop.f32.mrb[0].mxu0
    %v561 = vadd.f32 0.0, %v560
    %v562 = vpop.f32.mrb[0].mxu0
    %563 = vmatprep.mubr.f32.mxu0 0.0
    %564 = vmatmul.mubr.f32.gmra.mrb[0].mxu0 %v296
    %v565 = vpop.f32.mrb[0].mxu0
    %v566 = vadd.f32 0.0, %v565
    %v567 = vpop.f32.mrb[0].mxu0
    %568 = vmatprep.mubr.f32.mxu0 0.0
    %569 = vmatmul.mubr.f32.gmra.mrb[0].mxu0 %v299
    %v570 = vpop.f32.mrb[0].mxu0
    %v571 = vadd.f32 0.0, %v570
    %v572 = vpop.f32.mrb[0].mxu0
    %573 = vdwg.mxu0
    %v574 = vmul.f32 %v368, %v465
    %v575 = vmul.f32 %v373, %v470
    %v576 = vmul.f32 %v378, %v475
    %v577 = vmul.f32 %v383, %v480
    %v578 = vmul.f32 %v574, 0.35355338
    %v579 = vmul.f32 %v575, 0.35355338
    %v580 = vmul.f32 %v576, 0.35355338
    %v581 = vmul.f32 %v577, 0.35355338
    %v582 = vmax.f32 %v578, -5.0
    %v583 = vmax.f32 %v579, -5.0
    %v584 = vmax.f32 %v580, -5.0
    %v585 = vmax.f32 %v581, -5.0
    %v586 = vmin.f32 %v582, 5.0
    %v587 = vmin.f32 %v583, 5.0
    %v588 = vmin.f32 %v584, 5.0
    %v589 = vmin.f32 %v585, 5.0
    %v590 = vmul.f32 %v586, %v254
    %v591 = vmul.f32 %v587, %v259
    %v592 = vmul.f32 %v588, %v264
    %v593 = vmul.f32 %v589, %v269
    %v594 = vld [vmem:[%s5] sm:$0xff]
    %v595 = vld [vmem:[%s5 + $0x8] sm:$0xff]
    %v596 = vld [vmem:[%s5 + $0x10] sm:$0xff]
    %v597 = vld [vmem:[%s5 + $0x18] sm:$0xff]
    %v599 = vsel %vm82, %v590, 0
    %v602 = vsel %vm82, %v591, 0
    %v605 = vsel %vm82, %v592, 0
    %v608 = vsel %vm82, %v593, 0
    %610 = vmatprep.subr.mxu0 0.0
    %611 = vmatpush1.msra.mxu0 %v594
    %612 = vmatprep.subr.mxu0 0.0
    %613 = vmatpush1.msra.mxu0 %v595
    %614 = vmatprep.subr.mxu0 0.0
    %615 = vmatpush1.msra.mxu0 %v596
    %616 = vmatprep.subr.mxu0 0.0
    %617 = vmatpush1.msra.mxu0 %v597
    %618 = vmatprep.subr.mxu0 0.0
    %619 = vmatpush1.msra.mxu0 0.0
    %620 = vmatprep.subr.mxu0 0.0
    %621 = vmatpush1.msra.mxu0 0.0
    %622 = vmatprep.subr.mxu0 0.0
    %623 = vmatpush1.msra.mxu0 0.0
    %624 = vmatprep.subr.mxu0 0.0
    %625 = vmatpush1.msra.mxu0 0.0
    %626 = vmatprep.subr.mxu0 0.0
    %627 = vmatpush1.msra.mxu0 0.0
    %628 = vmatprep.subr.mxu0 0.0
    %629 = vmatpush1.msra.mxu0 0.0
    %630 = vmatprep.subr.mxu0 0.0
    %631 = vmatpush1.msra.mxu0 0.0
    %632 = vmatprep.subr.mxu0 0.0
    %633 = vmatpush1.msra.mxu0 0.0
    %634 = vmatprep.subr.mxu0 0.0
    %635 = vmatpush1.msra.mxu0 0.0
    %636 = vmatprep.subr.mxu0 0.0
    %637 = vmatpush1.msra.mxu0 0.0
    %638 = vmatprep.subr.mxu0 0.0
    %639 = vmatpush1.msra.mxu0 0.0
    %640 = vmatprep.subr.mxu0 0.0
    %641 = vmatpush1.msra.mxu0 0.0
    %642 = vmatprep.subr.mxu0 0.0
    %643 = vmatpush1.msra.mxu0 0.0
    %644 = vmatprep.subr.mxu0 0.0
    %645 = vmatpush1.msra.mxu0 0.0
    %646 = vmatprep.subr.mxu0 0.0
    %647 = vmatpush1.msra.mxu0 0.0
    %648 = vmatprep.subr.mxu0 0.0
    %649 = vmatpush1.msra.mxu0 0.0
    %650 = vmatprep.subr.mxu0 0.0
    %651 = vmatpush1.msra.mxu0 0.0
    %652 = vmatprep.subr.mxu0 0.0
    %653 = vmatpush1.msra.mxu0 0.0
    %654 = vmatprep.subr.mxu0 0.0
    %655 = vmatpush1.msra.mxu0 0.0
    %656 = vmatprep.subr.mxu0 0.0
    %657 = vmatpush1.msra.mxu0 0.0
    %658 = vmatprep.subr.mxu0 0.0
    %659 = vmatpush1.msra.mxu0 0.0
    %660 = vmatprep.subr.mxu0 0.0
    %661 = vmatpush1.msra.mxu0 0.0
    %662 = vmatprep.subr.mxu0 0.0
    %663 = vmatpush1.msra.mxu0 0.0
    %664 = vmatprep.subr.mxu0 0.0
    %665 = vmatpush1.msra.mxu0 0.0
    %666 = vmatprep.subr.mxu0 0.0
    %667 = vmatpush1.msra.mxu0 0.0
    %668 = vmatprep.subr.mxu0 0.0
    %669 = vmatpush1.msra.mxu0 0.0
    %670 = vmatprep.subr.mxu0 0.0
    %671 = vmatpush1.msra.mxu0 0.0
    %672 = vmatprep.subr.mxu0 0.0
    %673 = vmatpush1.msra.mxu0 0.0
    %674 = vmatprep.mubr.f32.mxu0 0.0
    %675 = vmatmul.mubr.f32.gmra.mrb[0].mxu0 %v599
    %v676 = vpop.f32.mrb[0].mxu0
    %v677 = vadd.f32 0.0, %v676
    %v678 = vpop.f32.mrb[0].mxu0
    %679 = vmatprep.mubr.f32.mxu0 0.0
    %680 = vmatmul.mubr.f32.gmra.mrb[0].mxu0 %v602
    %v681 = vpop.f32.mrb[0].mxu0
    %v682 = vadd.f32 0.0, %v681
    %v683 = vpop.f32.mrb[0].mxu0
    %684 = vmatprep.mubr.f32.mxu0 0.0
    %685 = vmatmul.mubr.f32.gmra.mrb[0].mxu0 %v605
    %v686 = vpop.f32.mrb[0].mxu0
    %v687 = vadd.f32 0.0, %v686
    %v688 = vpop.f32.mrb[0].mxu0
    %689 = vmatprep.mubr.f32.mxu0 0.0
    %690 = vmatmul.mubr.f32.gmra.mrb[0].mxu0 %v608
    %v691 = vpop.f32.mrb[0].mxu0
    %v692 = vadd.f32 0.0, %v691
    %v693 = vpop.f32.mrb[0].mxu0
    %694 = vdwg.mxu0
    %v695 = vmax.f32 %v677, -5.0
    %v696 = vmax.f32 %v682, -5.0
    %v697 = vmax.f32 %v687, -5.0
    %v698 = vmax.f32 %v692, -5.0
    %v699 = vmin.f32 %v695, 5.0
    %v700 = vmin.f32 %v696, 5.0
    %v701 = vmin.f32 %v697, 5.0
    %v702 = vmin.f32 %v698, 5.0
    %v703 = vmul.f32 %v699, 1.442695
    %v704 = vpow.pop %v703
    %v705 = vmul.f32 %v700, 1.442695
    %v706 = vpow.pop %v705
    %v707 = vmul.f32 %v701, 1.442695
    %v708 = vpow.pop %v707
    %v709 = vmul.f32 %v702, 1.442695
    %v710 = vpow.pop %v709
    %vm711 = vcmask 31744
    %v713 = vsel %vm711, %v704, 0
    %v716 = vsel %vm711, %v706, 0
    %v719 = vsel %vm711, %v708, 0
    %v722 = vsel %vm711, %v710, 0
    %v725 = vsel %vm711, %v594, 0
    %v728 = vsel %vm711, %v595, 0
    %v731 = vsel %vm711, %v596, 0
    %v734 = vsel %vm711, %v597, 0
    %736 = vmatprep.subr.mxu0 0.0
    %737 = vmatpush1.xpose.msra.mxu0 %v725
    %738 = vmatprep.subr.mxu0 0.0
    %739 = vmatpush1.xpose.msra.mxu0 %v728
    %740 = vmatprep.subr.mxu0 0.0
    %741 = vmatpush1.xpose.msra.mxu0 %v731
    %742 = vmatprep.subr.mxu0 0.0
    %743 = vmatpush1.xpose.msra.mxu0 %v734
    %744 = vmatprep.subr.mxu0 0.0
    %745 = vmatpush1.xpose.msra.mxu0 0.0
    %746 = vmatprep.subr.mxu0 0.0
    %747 = vmatpush1.xpose.msra.mxu0 0.0
    %748 = vmatprep.subr.mxu0 0.0
    %749 = vmatpush1.xpose.msra.mxu0 0.0
    %750 = vmatprep.subr.mxu0 0.0
    %751 = vmatpush1.xpose.msra.mxu0 0.0
    %752 = vmatprep.subr.mxu0 0.0
    %753 = vmatpush1.xpose.msra.mxu0 0.0
    %754 = vmatprep.subr.mxu0 0.0
    %755 = vmatpush1.xpose.msra.mxu0 0.0
    %756 = vmatprep.subr.mxu0 0.0
    %757 = vmatpush1.xpose.msra.mxu0 0.0
    %758 = vmatprep.subr.mxu0 0.0
    %759 = vmatpush1.xpose.msra.mxu0 0.0
    %760 = vmatprep.subr.mxu0 0.0
    %761 = vmatpush1.xpose.msra.mxu0 0.0
    %762 = vmatprep.subr.mxu0 0.0
    %763 = vmatpush1.xpose.msra.mxu0 0.0
    %764 = vmatprep.subr.mxu0 0.0
    %765 = vmatpush1.xpose.msra.mxu0 0.0
    %766 = vmatprep.subr.mxu0 0.0
    %767 = vmatpush1.xpose.msra.mxu0 0.0
    %768 = vmatprep.subr.mxu0 0.0
    %769 = vmatpush1.xpose.msra.mxu0 0.0
    %770 = vmatprep.subr.mxu0 0.0
    %771 = vmatpush1.xpose.msra.mxu0 0.0
    %772 = vmatprep.subr.mxu0 0.0
    %773 = vmatpush1.xpose.msra.mxu0 0.0
    %774 = vmatprep.subr.mxu0 0.0
    %775 = vmatpush1.xpose.msra.mxu0 0.0
    %776 = vmatprep.subr.mxu0 0.0
    %777 = vmatpush1.xpose.msra.mxu0 0.0
    %778 = vmatprep.subr.mxu0 0.0
    %779 = vmatpush1.xpose.msra.mxu0 0.0
    %780 = vmatprep.subr.mxu0 0.0
    %781 = vmatpush1.xpose.msra.mxu0 0.0
    %782 = vmatprep.subr.mxu0 0.0
    %783 = vmatpush1.xpose.msra.mxu0 0.0
    %784 = vmatprep.subr.mxu0 0.0
    %785 = vmatpush1.xpose.msra.mxu0 0.0
    %786 = vmatprep.subr.mxu0 0.0
    %787 = vmatpush1.xpose.msra.mxu0 0.0
    %788 = vmatprep.subr.mxu0 0.0
    %789 = vmatpush1.xpose.msra.mxu0 0.0
    %790 = vmatprep.subr.mxu0 0.0
    %791 = vmatpush1.xpose.msra.mxu0 0.0
    %792 = vmatprep.subr.mxu0 0.0
    %793 = vmatpush1.xpose.msra.mxu0 0.0
    %794 = vmatprep.subr.mxu0 0.0
    %795 = vmatpush1.xpose.msra.mxu0 0.0
    %796 = vmatprep.subr.mxu0 0.0
    %797 = vmatpush1.xpose.msra.mxu0 0.0
    %798 = vmatprep.subr.mxu0 0.0
    %799 = vmatpush1.xpose.msra.mxu0 0.0
    %800 = vmatprep.mubr.f32.mxu0 0.0
    %801 = vmatmul.mubr.f32.gmra.mrb[0].mxu0 %v713
    %v802 = vpop.f32.mrb[0].mxu0
    %v803 = vadd.f32 0.0, %v802
    %v804 = vpop.f32.mrb[0].mxu0
    %805 = vmatprep.mubr.f32.mxu0 0.0
    %806 = vmatmul.mubr.f32.gmra.mrb[0].mxu0 %v716
    %v807 = vpop.f32.mrb[0].mxu0
    %v808 = vadd.f32 0.0, %v807
    %v809 = vpop.f32.mrb[0].mxu0
    %810 = vmatprep.mubr.f32.mxu0 0.0
    %811 = vmatmul.mubr.f32.gmra.mrb[0].mxu0 %v719
    %v812 = vpop.f32.mrb[0].mxu0
    %v813 = vadd.f32 0.0, %v812
    %v814 = vpop.f32.mrb[0].mxu0
    %815 = vmatprep.mubr.f32.mxu0 0.0
    %816 = vmatmul.mubr.f32.gmra.mrb[0].mxu0 %v722
    %v817 = vpop.f32.mrb[0].mxu0
    %v818 = vadd.f32 0.0, %v817
    %v819 = vpop.f32.mrb[0].mxu0
    %820 = vdwg.mxu0
    %v821 = vmul.f32 %v556, %v803
    %v822 = vmul.f32 %v561, %v808
    %v823 = vmul.f32 %v566, %v813
    %v824 = vmul.f32 %v571, %v818
    %v825 = vld [vmem:[#allocation2] sm:$0xff]
    %v826 = vld [vmem:[#allocation2 + $0x8] sm:$0xff]
    %v828 = vsel %vm82, %v825, 0
    %v831 = vsel %vm82, %v826, 0
    %833 = vmatprep.subr.mxu0 0.0
    %834 = vmatpush1.msra.mxu0 %v821
    %835 = vmatprep.subr.mxu0 0.0
    %836 = vmatpush1.msra.mxu0 %v822
    %837 = vmatprep.subr.mxu0 0.0
    %838 = vmatpush1.msra.mxu0 %v823
    %839 = vmatprep.subr.mxu0 0.0
    %840 = vmatpush1.msra.mxu0 %v824
    %841 = vmatprep.subr.mxu0 0.0
    %842 = vmatpush1.msra.mxu0 0.0
    %843 = vmatprep.subr.mxu0 0.0
    %844 = vmatpush1.msra.mxu0 0.0
    %845 = vmatprep.subr.mxu0 0.0
    %846 = vmatpush1.msra.mxu0 0.0
    %847 = vmatprep.subr.mxu0 0.0
    %848 = vmatpush1.msra.mxu0 0.0
    %849 = vmatprep.subr.mxu0 0.0
    %850 = vmatpush1.msra.mxu0 0.0
    %851 = vmatprep.subr.mxu0 0.0
    %852 = vmatpush1.msra.mxu0 0.0
    %853 = vmatprep.subr.mxu0 0.0
    %854 = vmatpush1.msra.mxu0 0.0
    %855 = vmatprep.subr.mxu0 0.0
    %856 = vmatpush1.msra.mxu0 0.0
    %857 = vmatprep.subr.mxu0 0.0
    %858 = vmatpush1.msra.mxu0 0.0
    %859 = vmatprep.subr.mxu0 0.0
    %860 = vmatpush1.msra.mxu0 0.0
    %861 = vmatprep.subr.mxu0 0.0
    %862 = vmatpush1.msra.mxu0 0.0
    %863 = vmatprep.subr.mxu0 0.0
    %864 = vmatpush1.msra.mxu0 0.0
    %865 = vmatprep.subr.mxu0 0.0
    %866 = vmatpush1.msra.mxu0 0.0
    %867 = vmatprep.subr.mxu0 0.0
    %868 = vmatpush1.msra.mxu0 0.0
    %869 = vmatprep.subr.mxu0 0.0
    %870 = vmatpush1.msra.mxu0 0.0
    %871 = vmatprep.subr.mxu0 0.0
    %872 = vmatpush1.msra.mxu0 0.0
    %873 = vmatprep.subr.mxu0 0.0
    %874 = vmatpush1.msra.mxu0 0.0
    %875 = vmatprep.subr.mxu0 0.0
    %876 = vmatpush1.msra.mxu0 0.0
    %877 = vmatprep.subr.mxu0 0.0
    %878 = vmatpush1.msra.mxu0 0.0
    %879 = vmatprep.subr.mxu0 0.0
    %880 = vmatpush1.msra.mxu0 0.0
    %881 = vmatprep.subr.mxu0 0.0
    %882 = vmatpush1.msra.mxu0 0.0
    %883 = vmatprep.subr.mxu0 0.0
    %884 = vmatpush1.msra.mxu0 0.0
    %885 = vmatprep.subr.mxu0 0.0
    %886 = vmatpush1.msra.mxu0 0.0
    %887 = vmatprep.subr.mxu0 0.0
    %888 = vmatpush1.msra.mxu0 0.0
    %889 = vmatprep.subr.mxu0 0.0
    %890 = vmatpush1.msra.mxu0 0.0
    %891 = vmatprep.subr.mxu0 0.0
    %892 = vmatpush1.msra.mxu0 0.0
    %893 = vmatprep.subr.mxu0 0.0
    %894 = vmatpush1.msra.mxu0 0.0
    %895 = vmatprep.subr.mxu0 0.0
    %896 = vmatpush1.msra.mxu0 0.0
    %897 = vmatprep.mubr.f32.mxu0 0.0
    %898 = vmatmul.mubr.f32.gmra.mrb[0].mxu0 %v828
    %v899 = vpop.f32.mrb[0].mxu0
    %v900 = vadd.f32 0.0, %v899
    %v901 = vpop.f32.mrb[0].mxu0
    %902 = vmatprep.mubr.f32.mxu0 0.0
    %903 = vmatmul.mubr.f32.gmra.mrb[0].mxu0 %v831
    %v904 = vpop.f32.mrb[0].mxu0
    %v905 = vadd.f32 0.0, %v904
    %v906 = vpop.f32.mrb[0].mxu0
    %907 = vdwg.mxu0
    %908 = vmatprep.subr.mxu0 0.0
    %909 = vmatpush1.msra.mxu0 %v704
    %910 = vmatprep.subr.mxu0 0.0
    %911 = vmatpush1.msra.mxu0 %v706
    %912 = vmatprep.subr.mxu0 0.0
    %913 = vmatpush1.msra.mxu0 %v708
    %914 = vmatprep.subr.mxu0 0.0
    %915 = vmatpush1.msra.mxu0 %v710
    %916 = vmatprep.subr.mxu0 0.0
    %917 = vmatpush1.msra.mxu0 0.0
    %918 = vmatprep.subr.mxu0 0.0
    %919 = vmatpush1.msra.mxu0 0.0
    %920 = vmatprep.subr.mxu0 0.0
    %921 = vmatpush1.msra.mxu0 0.0
    %922 = vmatprep.subr.mxu0 0.0
    %923 = vmatpush1.msra.mxu0 0.0
    %924 = vmatprep.subr.mxu0 0.0
    %925 = vmatpush1.msra.mxu0 0.0
    %926 = vmatprep.subr.mxu0 0.0
    %927 = vmatpush1.msra.mxu0 0.0
    %928 = vmatprep.subr.mxu0 0.0
    %929 = vmatpush1.msra.mxu0 0.0
    %930 = vmatprep.subr.mxu0 0.0
    %931 = vmatpush1.msra.mxu0 0.0
    %932 = vmatprep.subr.mxu0 0.0
    %933 = vmatpush1.msra.mxu0 0.0
    %934 = vmatprep.subr.mxu0 0.0
    %935 = vmatpush1.msra.mxu0 0.0
    %936 = vmatprep.subr.mxu0 0.0
    %937 = vmatpush1.msra.mxu0 0.0
    %938 = vmatprep.subr.mxu0 0.0
    %939 = vmatpush1.msra.mxu0 0.0
    %940 = vmatprep.subr.mxu0 0.0
    %941 = vmatpush1.msra.mxu0 0.0
    %942 = vmatprep.subr.mxu0 0.0
    %943 = vmatpush1.msra.mxu0 0.0
    %944 = vmatprep.subr.mxu0 0.0
    %945 = vmatpush1.msra.mxu0 0.0
    %946 = vmatprep.subr.mxu0 0.0
    %947 = vmatpush1.msra.mxu0 0.0
    %948 = vmatprep.subr.mxu0 0.0
    %949 = vmatpush1.msra.mxu0 0.0
    %950 = vmatprep.subr.mxu0 0.0
    %951 = vmatpush1.msra.mxu0 0.0
    %952 = vmatprep.subr.mxu0 0.0
    %953 = vmatpush1.msra.mxu0 0.0
    %954 = vmatprep.subr.mxu0 0.0
    %955 = vmatpush1.msra.mxu0 0.0
    %956 = vmatprep.subr.mxu0 0.0
    %957 = vmatpush1.msra.mxu0 0.0
    %958 = vmatprep.subr.mxu0 0.0
    %959 = vmatpush1.msra.mxu0 0.0
    %960 = vmatprep.subr.mxu0 0.0
    %961 = vmatpush1.msra.mxu0 0.0
    %962 = vmatprep.subr.mxu0 0.0
    %963 = vmatpush1.msra.mxu0 0.0
    %964 = vmatprep.subr.mxu0 0.0
    %965 = vmatpush1.msra.mxu0 0.0
    %966 = vmatprep.subr.mxu0 0.0
    %967 = vmatpush1.msra.mxu0 0.0
    %968 = vmatprep.subr.mxu0 0.0
    %969 = vmatpush1.msra.mxu0 0.0
    %970 = vmatprep.subr.mxu0 0.0
    %971 = vmatpush1.msra.mxu0 0.0
    %972 = vmatprep.mubr.f32.mxu0 0.0
    %973 = vmatmul.mubr.f32.gmra.mrb[0].mxu0 %v828
    %v974 = vpop.f32.mrb[0].mxu0
    %v975 = vadd.f32 0.0, %v974
    %v976 = vpop.f32.mrb[0].mxu0
    %977 = vmatprep.mubr.f32.mxu0 0.0
    %978 = vmatmul.mubr.f32.gmra.mrb[0].mxu0 %v831
    %v979 = vpop.f32.mrb[0].mxu0
    %v980 = vadd.f32 0.0, %v979
    %v981 = vpop.f32.mrb[0].mxu0
    %982 = vdwg.mxu0
    %v984 = vsel %vm711, %v975, 0
    %v987 = vsel %vm711, %v980, 0
    %989 = vmatprep.subr.mxu0 0.0
    %990 = vmatpush1.xpose.msra.mxu0 %v725
    %991 = vmatprep.subr.mxu0 0.0
    %992 = vmatpush1.xpose.msra.mxu0 %v728
    %993 = vmatprep.subr.mxu0 0.0
    %994 = vmatpush1.xpose.msra.mxu0 %v731
    %995 = vmatprep.subr.mxu0 0.0
    %996 = vmatpush1.xpose.msra.mxu0 %v734
    %997 = vmatprep.subr.mxu0 0.0
    %998 = vmatpush1.xpose.msra.mxu0 0.0
    %999 = vmatprep.subr.mxu0 0.0
    %1000 = vmatpush1.xpose.msra.mxu0 0.0
    %1001 = vmatprep.subr.mxu0 0.0
    %1002 = vmatpush1.xpose.msra.mxu0 0.0
    %1003 = vmatprep.subr.mxu0 0.0
    %1004 = vmatpush1.xpose.msra.mxu0 0.0
    %1005 = vmatprep.subr.mxu0 0.0
    %1006 = vmatpush1.xpose.msra.mxu0 0.0
    %1007 = vmatprep.subr.mxu0 0.0
    %1008 = vmatpush1.xpose.msra.mxu0 0.0
    %1009 = vmatprep.subr.mxu0 0.0
    %1010 = vmatpush1.xpose.msra.mxu0 0.0
    %1011 = vmatprep.subr.mxu0 0.0
    %1012 = vmatpush1.xpose.msra.mxu0 0.0
    %1013 = vmatprep.subr.mxu0 0.0
    %1014 = vmatpush1.xpose.msra.mxu0 0.0
    %1015 = vmatprep.subr.mxu0 0.0
    %1016 = vmatpush1.xpose.msra.mxu0 0.0
    %1017 = vmatprep.subr.mxu0 0.0
    %1018 = vmatpush1.xpose.msra.mxu0 0.0
    %1019 = vmatprep.subr.mxu0 0.0
    %1020 = vmatpush1.xpose.msra.mxu0 0.0
    %1021 = vmatprep.subr.mxu0 0.0
    %1022 = vmatpush1.xpose.msra.mxu0 0.0
    %1023 = vmatprep.subr.mxu0 0.0
    %1024 = vmatpush1.xpose.msra.mxu0 0.0
    %1025 = vmatprep.subr.mxu0 0.0
    %1026 = vmatpush1.xpose.msra.mxu0 0.0
    %1027 = vmatprep.subr.mxu0 0.0
    %1028 = vmatpush1.xpose.msra.mxu0 0.0
    %1029 = vmatprep.subr.mxu0 0.0
    %1030 = vmatpush1.xpose.msra.mxu0 0.0
    %1031 = vmatprep.subr.mxu0 0.0
    %1032 = vmatpush1.xpose.msra.mxu0 0.0
    %1033 = vmatprep.subr.mxu0 0.0
    %1034 = vmatpush1.xpose.msra.mxu0 0.0
    %1035 = vmatprep.subr.mxu0 0.0
    %1036 = vmatpush1.xpose.msra.mxu0 0.0
    %1037 = vmatprep.subr.mxu0 0.0
    %1038 = vmatpush1.xpose.msra.mxu0 0.0
    %1039 = vmatprep.subr.mxu0 0.0
    %1040 = vmatpush1.xpose.msra.mxu0 0.0
    %1041 = vmatprep.subr.mxu0 0.0
    %1042 = vmatpush1.xpose.msra.mxu0 0.0
    %1043 = vmatprep.subr.mxu0 0.0
    %1044 = vmatpush1.xpose.msra.mxu0 0.0
    %1045 = vmatprep.subr.mxu0 0.0
    %1046 = vmatpush1.xpose.msra.mxu0 0.0
    %1047 = vmatprep.subr.mxu0 0.0
    %1048 = vmatpush1.xpose.msra.mxu0 0.0
    %1049 = vmatprep.subr.mxu0 0.0
    %1050 = vmatpush1.xpose.msra.mxu0 0.0
    %1051 = vmatprep.subr.mxu0 0.0
    %1052 = vmatpush1.xpose.msra.mxu0 0.0
    %1053 = vmatprep.mubr.f32.mxu0 0.0
    %1054 = vmatmul.mubr.f32.gmra.mrb[0].mxu0 %v984
    %v1055 = vpop.f32.mrb[0].mxu0
    %v1056 = vadd.f32 1e-06, %v1055
    %v1057 = vpop.f32.mrb[0].mxu0
    %1058 = vmatprep.mubr.f32.mxu0 0.0
    %1059 = vmatmul.mubr.f32.gmra.mrb[0].mxu0 %v987
    %v1060 = vpop.f32.mrb[0].mxu0
    %v1061 = vadd.f32 1e-06, %v1060
    %v1062 = vpop.f32.mrb[0].mxu0
    %1063 = vdwg.mxu0
    %v1064 = vrcp.pop %v1056
    %v1065 = vrcp.pop %v1061
    %v1066 = vmul.f32 %v900, %v1064
    %v1067 = vmul.f32 %v905, %v1065
    %v1068 = vld [vmem:[%s10] sm:$0xff]
    %v1069 = vld [vmem:[%s10 + $0x8] sm:$0xff]
    %v1070 = vld [vmem:[%s10 + $0x10] sm:$0xff]
    %v1071 = vld [vmem:[%s10 + $0x18] sm:$0xff]
    %v1073 = vsel %vm82, %v1066, 0
    %v1076 = vsel %vm82, %v1067, 0
    %1078 = vmatprep.subr.mxu0 0.0
    %1079 = vmatpush1.msra.mxu0 %v1068
    %1080 = vmatprep.subr.mxu0 0.0
    %1081 = vmatpush1.msra.mxu0 %v1069
    %1082 = vmatprep.subr.mxu0 0.0
    %1083 = vmatpush1.msra.mxu0 %v1070
    %1084 = vmatprep.subr.mxu0 0.0
    %1085 = vmatpush1.msra.mxu0 %v1071
    %1086 = vmatprep.subr.mxu0 0.0
    %1087 = vmatpush1.msra.mxu0 0.0
    %1088 = vmatprep.subr.mxu0 0.0
    %1089 = vmatpush1.msra.mxu0 0.0
    %1090 = vmatprep.subr.mxu0 0.0
    %1091 = vmatpush1.msra.mxu0 0.0
    %1092 = vmatprep.subr.mxu0 0.0
    %1093 = vmatpush1.msra.mxu0 0.0
    %1094 = vmatprep.subr.mxu0 0.0
    %1095 = vmatpush1.msra.mxu0 0.0
    %1096 = vmatprep.subr.mxu0 0.0
    %1097 = vmatpush1.msra.mxu0 0.0
    %1098 = vmatprep.subr.mxu0 0.0
    %1099 = vmatpush1.msra.mxu0 0.0
    %1100 = vmatprep.subr.mxu0 0.0
    %1101 = vmatpush1.msra.mxu0 0.0
    %1102 = vmatprep.subr.mxu0 0.0
    %1103 = vmatpush1.msra.mxu0 0.0
    %1104 = vmatprep.subr.mxu0 0.0
    %1105 = vmatpush1.msra.mxu0 0.0
    %1106 = vmatprep.subr.mxu0 0.0
    %1107 = vmatpush1.msra.mxu0 0.0
    %1108 = vmatprep.subr.mxu0 0.0
    %1109 = vmatpush1.msra.mxu0 0.0
    %1110 = vmatprep.subr.mxu0 0.0
    %1111 = vmatpush1.msra.mxu0 0.0
    %1112 = vmatprep.subr.mxu0 0.0
    %1113 = vmatpush1.msra.mxu0 0.0
    %1114 = vmatprep.subr.mxu0 0.0
    %1115 = vmatpush1.msra.mxu0 0.0
    %1116 = vmatprep.subr.mxu0 0.0
    %1117 = vmatpush1.msra.mxu0 0.0
    %1118 = vmatprep.subr.mxu0 0.0
    %1119 = vmatpush1.msra.mxu0 0.0
    %1120 = vmatprep.subr.mxu0 0.0
    %1121 = vmatpush1.msra.mxu0 0.0
    %1122 = vmatprep.subr.mxu0 0.0
    %1123 = vmatpush1.msra.mxu0 0.0
    %1124 = vmatprep.subr.mxu0 0.0
    %1125 = vmatpush1.msra.mxu0 0.0
    %1126 = vmatprep.subr.mxu0 0.0
    %1127 = vmatpush1.msra.mxu0 0.0
    %1128 = vmatprep.subr.mxu0 0.0
    %1129 = vmatpush1.msra.mxu0 0.0
    %1130 = vmatprep.subr.mxu0 0.0
    %1131 = vmatpush1.msra.mxu0 0.0
    %1132 = vmatprep.subr.mxu0 0.0
    %1133 = vmatpush1.msra.mxu0 0.0
    %1134 = vmatprep.subr.mxu0 0.0
    %1135 = vmatpush1.msra.mxu0 0.0
    %1136 = vmatprep.subr.mxu0 0.0
    %1137 = vmatpush1.msra.mxu0 0.0
    %1138 = vmatprep.subr.mxu0 0.0
    %1139 = vmatpush1.msra.mxu0 0.0
    %1140 = vmatprep.subr.mxu0 0.0
    %1141 = vmatpush1.msra.mxu0 0.0
    %1142 = vmatprep.mubr.f32.mxu0 0.0
    %1143 = vmatmul.mubr.f32.gmra.mrb[0].mxu0 %v1073
    %v1144 = vpop.f32.mrb[0].mxu0
    %v1145 = vadd.f32 0.0, %v1144
    %v1146 = vpop.f32.mrb[0].mxu0
    %1147 = vmatprep.mubr.f32.mxu0 0.0
    %1148 = vmatmul.mubr.f32.gmra.mrb[0].mxu0 %v1076
    %v1149 = vpop.f32.mrb[0].mxu0
    %v1150 = vadd.f32 0.0, %v1149
    %v1151 = vpop.f32.mrb[0].mxu0
    %1152 = vdwg.mxu0
    %v1153 = vadd.f32 %v65, %v1145
    %v1154 = vadd.f32 %v66, %v1150
    %v1155 = vld [vmem:[%s11] sm:$0x1]
    %v1157 = vlaneseq
    %v1158 = vshrl.u32 %v1157, 7
    %v1159 = vsub.s32 0, %v1158
    %v1160 = vrot.slane %v1155, %v1159
    %v1162 = vadd.f32 %v1153, %v1160
    %v1163 = vadd.f32 %v1154, %v1160
    %v1164 = vld [vmem:[%s12] sm:$0xff]
    %v1165 = vld [vmem:[%s12 + $0x8] sm:$0xff]
    %v1166 = vld [vmem:[%s12 + $0x10] sm:$0xff]
    %v1167 = vld [vmem:[%s12 + $0x18] sm:$0xff]
    %v1168 = vld [vmem:[%s13] sm:$0x1]
    %v1170 = vlaneseq
    %v1171 = vshrl.u32 %v1170, 7
    %v1172 = vsub.s32 0, %v1171
    %v1173 = vrot.slane %v1168, %v1172
    %v1176 = vsel %vm82, %v1162, 0
    %v1179 = vsel %vm82, %v1163, 0
    %1181 = vmatprep.subr.mxu0 0.0
    %1182 = vmatpush1.msra.mxu0 %v1164
    %1183 = vmatprep.subr.mxu0 0.0
    %1184 = vmatpush1.msra.mxu0 %v1165
    %1185 = vmatprep.subr.mxu0 0.0
    %1186 = vmatpush1.msra.mxu0 %v1166
    %1187 = vmatprep.subr.mxu0 0.0
    %1188 = vmatpush1.msra.mxu0 %v1167
    %1189 = vmatprep.subr.mxu0 0.0
    %1190 = vmatpush1.msra.mxu0 0.0
    %1191 = vmatprep.subr.mxu0 0.0
    %1192 = vmatpush1.msra.mxu0 0.0
    %1193 = vmatprep.subr.mxu0 0.0
    %1194 = vmatpush1.msra.mxu0 0.0
    %1195 = vmatprep.subr.mxu0 0.0
    %1196 = vmatpush1.msra.mxu0 0.0
    %1197 = vmatprep.subr.mxu0 0.0
    %1198 = vmatpush1.msra.mxu0 0.0
    %1199 = vmatprep.subr.mxu0 0.0
    %1200 = vmatpush1.msra.mxu0 0.0
    %1201 = vmatprep.subr.mxu0 0.0
    %1202 = vmatpush1.msra.mxu0 0.0
    %1203 = vmatprep.subr.mxu0 0.0
    %1204 = vmatpush1.msra.mxu0 0.0
    %1205 = vmatprep.subr.mxu0 0.0
    %1206 = vmatpush1.msra.mxu0 0.0
    %1207 = vmatprep.subr.mxu0 0.0
    %1208 = vmatpush1.msra.mxu0 0.0
    %1209 = vmatprep.subr.mxu0 0.0
    %1210 = vmatpush1.msra.mxu0 0.0
    %1211 = vmatprep.subr.mxu0 0.0
    %1212 = vmatpush1.msra.mxu0 0.0
    %1213 = vmatprep.subr.mxu0 0.0
    %1214 = vmatpush1.msra.mxu0 0.0
    %1215 = vmatprep.subr.mxu0 0.0
    %1216 = vmatpush1.msra.mxu0 0.0
    %1217 = vmatprep.subr.mxu0 0.0
    %1218 = vmatpush1.msra.mxu0 0.0
    %1219 = vmatprep.subr.mxu0 0.0
    %1220 = vmatpush1.msra.mxu0 0.0
    %1221 = vmatprep.subr.mxu0 0.0
    %1222 = vmatpush1.msra.mxu0 0.0
    %1223 = vmatprep.subr.mxu0 0.0
    %1224 = vmatpush1.msra.mxu0 0.0
    %1225 = vmatprep.subr.mxu0 0.0
    %1226 = vmatpush1.msra.mxu0 0.0
    %1227 = vmatprep.subr.mxu0 0.0
    %1228 = vmatpush1.msra.mxu0 0.0
    %1229 = vmatprep.subr.mxu0 0.0
    %1230 = vmatpush1.msra.mxu0 0.0
    %1231 = vmatprep.subr.mxu0 0.0
    %1232 = vmatpush1.msra.mxu0 0.0
    %1233 = vmatprep.subr.mxu0 0.0
    %1234 = vmatpush1.msra.mxu0 0.0
    %1235 = vmatprep.subr.mxu0 0.0
    %1236 = vmatpush1.msra.mxu0 0.0
    %1237 = vmatprep.subr.mxu0 0.0
    %1238 = vmatpush1.msra.mxu0 0.0
    %1239 = vmatprep.subr.mxu0 0.0
    %1240 = vmatpush1.msra.mxu0 0.0
    %1241 = vmatprep.subr.mxu0 0.0
    %1242 = vmatpush1.msra.mxu0 0.0
    %1243 = vmatprep.subr.mxu0 0.0
    %1244 = vmatpush1.msra.mxu0 0.0
    %1245 = vmatprep.mubr.f32.mxu0 0.0
    %1246 = vmatmul.mubr.f32.gmra.mrb[0].mxu0 %v1176
    %v1247 = vpop.f32.mrb[0].mxu0
    %v1248 = vadd.f32 %v1173, %v1247
    %v1249 = vpop.f32.mrb[0].mxu0
    %1250 = vmatprep.mubr.f32.mxu0 0.0
    %1251 = vmatmul.mubr.f32.gmra.mrb[0].mxu0 %v1179
    %v1252 = vpop.f32.mrb[0].mxu0
    %v1253 = vadd.f32 %v1173, %v1252
    %v1254 = vpop.f32.mrb[0].mxu0
    %1255 = vdwg.mxu0
    %v1256 = vsub.f32 0.0, %v1248
    %v1257 = vsub.f32 0.0, %v1253
    %v1258 = vmul.f32 %v1256, 1.442695
    %v1259 = vpow.pop %v1258
    %v1260 = vmul.f32 %v1257, 1.442695
    %v1261 = vpow.pop %v1260
    %v1262 = vadd.f32 %v1259, 1.0
    %v1263 = vadd.f32 %v1261, 1.0
    %v1264 = vrcp.pop %v1262
    %v1265 = vrcp.pop %v1263
    %v1266 = vmul.f32 %v1248, %v1264
    %v1267 = vmul.f32 %v1253, %v1265
    %v1268 = vld [vmem:[%s14] sm:$0xff]
    %v1269 = vld [vmem:[%s14 + $0x8] sm:$0xff]
    %v1270 = vld [vmem:[%s14 + $0x10] sm:$0xff]
    %v1271 = vld [vmem:[%s14 + $0x18] sm:$0xff]
    %v1272 = vld [vmem:[%s14 + $0x20] sm:$0xff]
    %v1273 = vld [vmem:[%s14 + $0x28] sm:$0xff]
    %v1274 = vld [vmem:[%s14 + $0x30] sm:$0xff]
    %v1275 = vld [vmem:[%s14 + $0x38] sm:$0xff]
    %vm1276 = vcmask 523264
    %v1278 = vsel %vm1276, %v1266, 0
    %v1281 = vsel %vm1276, %v1267, 0
    %1283 = vmatprep.subr.mxu0 0.0
    %1284 = vmatpush1.msra.mxu0 %v1268
    %1285 = vmatprep.subr.mxu0 0.0
    %1286 = vmatpush1.msra.mxu0 %v1269
    %1287 = vmatprep.subr.mxu0 0.0
    %1288 = vmatpush1.msra.mxu0 %v1270
    %1289 = vmatprep.subr.mxu0 0.0
    %1290 = vmatpush1.msra.mxu0 %v1271
    %1291 = vmatprep.subr.mxu0 0.0
    %1292 = vmatpush1.msra.mxu0 %v1272
    %1293 = vmatprep.subr.mxu0 0.0
    %1294 = vmatpush1.msra.mxu0 %v1273
    %1295 = vmatprep.subr.mxu0 0.0
    %1296 = vmatpush1.msra.mxu0 %v1274
    %1297 = vmatprep.subr.mxu0 0.0
    %1298 = vmatpush1.msra.mxu0 %v1275
    %1299 = vmatprep.subr.mxu0 0.0
    %1300 = vmatpush1.msra.mxu0 0.0
    %1301 = vmatprep.subr.mxu0 0.0
    %1302 = vmatpush1.msra.mxu0 0.0
    %1303 = vmatprep.subr.mxu0 0.0
    %1304 = vmatpush1.msra.mxu0 0.0
    %1305 = vmatprep.subr.mxu0 0.0
    %1306 = vmatpush1.msra.mxu0 0.0
    %1307 = vmatprep.subr.mxu0 0.0
    %1308 = vmatpush1.msra.mxu0 0.0
    %1309 = vmatprep.subr.mxu0 0.0
    %1310 = vmatpush1.msra.mxu0 0.0
    %1311 = vmatprep.subr.mxu0 0.0
    %1312 = vmatpush1.msra.mxu0 0.0
    %1313 = vmatprep.subr.mxu0 0.0
    %1314 = vmatpush1.msra.mxu0 0.0
    %1315 = vmatprep.subr.mxu0 0.0
    %1316 = vmatpush1.msra.mxu0 0.0
    %1317 = vmatprep.subr.mxu0 0.0
    %1318 = vmatpush1.msra.mxu0 0.0
    %1319 = vmatprep.subr.mxu0 0.0
    %1320 = vmatpush1.msra.mxu0 0.0
    %1321 = vmatprep.subr.mxu0 0.0
    %1322 = vmatpush1.msra.mxu0 0.0
    %1323 = vmatprep.subr.mxu0 0.0
    %1324 = vmatpush1.msra.mxu0 0.0
    %1325 = vmatprep.subr.mxu0 0.0
    %1326 = vmatpush1.msra.mxu0 0.0
    %1327 = vmatprep.subr.mxu0 0.0
    %1328 = vmatpush1.msra.mxu0 0.0
    %1329 = vmatprep.subr.mxu0 0.0
    %1330 = vmatpush1.msra.mxu0 0.0
    %1331 = vmatprep.subr.mxu0 0.0
    %1332 = vmatpush1.msra.mxu0 0.0
    %1333 = vmatprep.subr.mxu0 0.0
    %1334 = vmatpush1.msra.mxu0 0.0
    %1335 = vmatprep.subr.mxu0 0.0
    %1336 = vmatpush1.msra.mxu0 0.0
    %1337 = vmatprep.subr.mxu0 0.0
    %1338 = vmatpush1.msra.mxu0 0.0
    %1339 = vmatprep.subr.mxu0 0.0
    %1340 = vmatpush1.msra.mxu0 0.0
    %1341 = vmatprep.subr.mxu0 0.0
    %1342 = vmatpush1.msra.mxu0 0.0
    %1343 = vmatprep.subr.mxu0 0.0
    %1344 = vmatpush1.msra.mxu0 0.0
    %1345 = vmatprep.subr.mxu0 0.0
    %1346 = vmatpush1.msra.mxu0 0.0
    %1347 = vmatprep.mubr.f32.mxu0 0.0
    %1348 = vmatmul.mubr.f32.gmra.mrb[0].mxu0 %v1278
    %v1349 = vpop.f32.mrb[0].mxu0
    %v1350 = vadd.f32 0.0, %v1349
    %v1351 = vpop.f32.mrb[0].mxu0
    %1352 = vmatprep.mubr.f32.mxu0 0.0
    %1353 = vmatmul.mubr.f32.gmra.mrb[0].mxu0 %v1281
    %v1354 = vpop.f32.mrb[0].mxu0
    %v1355 = vadd.f32 0.0, %v1354
    %v1356 = vpop.f32.mrb[0].mxu0
    %1357 = vdwg.mxu0
    %v1358 = vadd.f32 %v1162, %v1350
    %v1359 = vadd.f32 %v1163, %v1355
    %1360 = vst.msk [vmem:[#allocation5] sm:$0xff] %vm82, %v1358
    %1361 = vst.msk [vmem:[#allocation5 + $0x8] sm:$0xff] %vm82, %v1359
    // Predicated region
    $region66: #{tpu_custom_call.1} parent=1 // pred_check
      _
    $region67: #{tpu_custom_call.1} parent=1 // pred_check_branch
      %1363 = sbr.rel (0) target = $region69
    $region68: #{tpu_custom_call.1} parent=1 // pred_region
      %s1365 = ssub.s32 256, 256
      %1366 = vsyncadd [#allocation4], %s1365
      %s1367 = sshll.u32 [#allocation5], 4
      %s1368 = int_to_ptr.vmem [resolvable:$true] %s1367
      %1373 = dma.vmem_to_hbm [thread:$0]  %s1368, 256, %s15, [#allocation4], 128, 128, 8
    $region69: #{tpu_custom_call.1} parent=1 // pred_fallthru
      _
    // Predicated region
    $region70: #{tpu_custom_call.1} parent=1 // pred_check
      _
    $region71: #{tpu_custom_call.1} parent=1 // pred_check_branch
      %1375 = sbr.rel (0) target = $region73
    $region72: #{tpu_custom_call.1} parent=1 // pred_region
      %1376 = dma.done [#allocation4], 256
    $region73: #{tpu_custom_call.1} parent=1 // pred_fallthru
      _
    %1377 = vsyncpa [#allocation3], 1
    %1378 = vsyncpa [#allocation4], 1

</llo_original>
